<compile_context>
chip_gen: v6e
topology: v6e:2x2x1
jax: 0.10.0
libtpu: 0.0.40
codegen_flags: <defaults>
</compile_context>

<pallas_src>
import functools

import jax
import jax.numpy as jnp
from jax import lax
from jax.experimental import pallas as pl
from jax.experimental.pallas import tpu as pltpu

_MIB = 1024 * 1024
_BF16_BYTES = 2
_F32_BYTES = 4


def _round_up(x, m):
    return ((x + m - 1) // m) * m


def _pad2d(x, rows, cols):
    r, c = x.shape
    return jnp.pad(x, ((0, rows - r), (0, cols - c)))


def _buffered1_supported():
    """True if this jax accepts BlockSpec(..., pipeline_mode=pl.Buffered(1))."""
    try:
        pl.BlockSpec((8, 128), lambda i: (0, 0), pipeline_mode=pl.Buffered(1))
        return True
    except Exception:
        return False


_USE_SINGLE_BUFFER = _buffered1_supported()
_RES_NBUF = 1 if _USE_SINGLE_BUFFER else 2   # buffers per resident operand


def _resident_spec(shape, index_map, single):
    """Spec for a grid-invariant VMEM-resident operand (single-buffer if possible)."""
    if single:
        return pl.BlockSpec(shape, index_map, pipeline_mode=pl.Buffered(1))
    return pl.BlockSpec(shape, index_map)


def _call_with_fallback(build_fn, args):
    """build_fn(single_buffer) -> pallas callable; retry double-buffered
    residents if Buffered(1) is rejected by this jax / Mosaic version."""
    try:
        return build_fn(_USE_SINGLE_BUFFER)(*args)
    except Exception:
        if not _USE_SINGLE_BUFFER:
            raise
        return build_fn(False)(*args)


def _vmem_budget_and_cap():
    """Per-generation VMEM: 64 MiB/TC on v7x, 128 MiB on v5e/v6e."""
    try:
        cap = int(pltpu.get_tpu_info().vmem_capacity_bytes)
    except Exception:        # query unavailable (e.g. interpret) -> conservative
        cap = 64 * _MIB
    budget = max(8 * _MIB, min(cap - 16 * _MIB, int(cap * 0.75)))
    return budget, cap


def _attn_live_bytes(tq, ng_p, d_p, dk_p, out_itemsize):
    """Double-buffer-aware VMEM estimate for the attention+embed kernel."""
    resident = _RES_NBUF * (_BF16_BYTES * (dk_p * ng_p + ng_p * d_p + dk_p * d_p)
                            + _F32_BYTES * (d_p + ng_p))          # glT, gw2, W1, b, mask
    streamed = 2 * (_BF16_BYTES * tq * dk_p + out_itemsize * tq * d_p)  # q/out, 2 bufs
    compute = _F32_BYTES * tq * (3 * ng_p + 2 * d_p)              # att/e/sm + emb temps
    return resident + streamed + compute


def _fold_live_bytes(tg, ng_p, d_p, dk_p):
    resident = _RES_NBUF * _BF16_BYTES * (ng_p * dk_p + dk_p * d_p)     # [g|pg], W2
    streamed = 2 * _BF16_BYTES * (ng_p * tg + dk_p * tg + tg * d_p)     # lbl tile + outs
    compute = _F32_BYTES * tg * (dk_p + d_p)                            # f32 dot temps
    return resident + streamed + compute


def _pick_tq(nq, ng_p, d_p, dk_p, out_itemsize, budget):
    """Largest bf16-friendly query tile that fits VMEM with bounded row padding."""
    nq16 = max(16, _round_up(nq, 16))
    feasible = [tq for tq in (512, 256, 128, 64, 32, 16)
                if tq <= nq16
                and _attn_live_bytes(tq, ng_p, d_p, dk_p, out_itemsize) <= budget]
    if not feasible:
        return 16
    # Bound wasted padded query rows: <=12.5% relative or one 128-row tile.
    limit = max(nq16 + 128, int(nq16 * 1.125))
    for tq in feasible:                     # descending
        if _round_up(nq, tq) <= limit:
            return tq
    return feasible[-1]                     # smallest feasible -> least padding


def _pick_tg(ng_p, d_p, dk_p, budget):
    for tg in (512, 256, 128):
        if ng_p % tg == 0 and _fold_live_bytes(tg, ng_p, d_p, dk_p) <= budget:
            return tg
    return 128


# --------------------------------------------------------------------------
# Kernel 1: query-independent gallery fold, tiled over gallery blocks.
# --------------------------------------------------------------------------
def _gallery_fold_kernel(lbl_ref, ga_ref, w2_ref, glt_ref, gw2_ref, *, tg):
    ga = ga_ref[...]                                    # (Ng_p, Dk_p) bf16, resident
    # glT[:, tile] = [g|pg].T @ label[:, tile]   (contract gallery rows, f32 acc)
    glt_ref[...] = lax.dot_general(
        ga, lbl_ref[...], (((0,), (0,)), ((), ())),
        preferred_element_type=jnp.float32).astype(glt_ref.dtype)
    # gw2[tile, :] = [g|pg][tile, :] @ W2_aug   (rows >= D of W2_aug are zero)
    row0 = pl.multiple_of(pl.program_id(0) * tg, tg)
    gw2_ref[...] = jnp.dot(
        ga_ref[pl.ds(row0, tg), :], w2_ref[...],
        preferred_element_type=jnp.float32).astype(gw2_ref.dtype)


# --------------------------------------------------------------------------
# Kernel 2: attention + embed, tiled over query rows.
# --------------------------------------------------------------------------
def _attn_embed_kernel(q_ref, glt_ref, gw2_ref, w1_ref, b_ref, mask_ref, out_ref):
    qa = q_ref[...]                                               # (TQ, Dk_p) bf16
    # att_all = (q@g.T + pq@pg.T) @ L  ==  [q|pq] @ ([g|pg].T @ L); bf16 MXU, f32 acc.
    att = jnp.dot(qa, glt_ref[...],
                  preferred_element_type=jnp.float32)             # (TQ, Ng_p) f32
    att = att + mask_ref[...]                                     # -1e30 on padded cols

    # Row softmax (dim=1) in f32: EUP exp + approx reciprocal.
    m = jnp.max(att, axis=-1, keepdims=True)
    e = jnp.exp(att - m)
    sm = e * pl.reciprocal(jnp.sum(e, axis=-1, keepdims=True), approx=True)

    # tanh(q @ W1 + (softmax @ g) @ W2 + b); r@W2 is pre-folded into gw2.
    emb = (jnp.dot(qa, w1_ref[...], preferred_element_type=jnp.float32)
           + jnp.dot(sm.astype(jnp.bfloat16), gw2_ref[...],
                     preferred_element_type=jnp.float32)
           + b_ref[...])
    out_ref[...] = jnp.tanh(emb).astype(out_ref.dtype)


def attentional_embed(query_encode, gallery_encode, gallery_label,
                      pos_feat_q, pos_feat_g, emb_weight, emb_bias):
    """Forward of the attention + matching-net embed path.

    emb_weight: (D, 2D) PyTorch nn.Linear layout; emb_bias: (D,).
    """
    nq, d = query_encode.shape
    ng = gallery_encode.shape[0]
    p = pos_feat_q.shape[1]
    out_dtype = query_encode.dtype
    out_isz = jnp.dtype(out_dtype).itemsize

    # Lane-dense padded dims (multiples of 128).
    d_p = _round_up(d, 128)           # embed feature dim
    dk_p = _round_up(d + p, 128)      # [encode | pos] contraction dim
    ng_p = _round_up(ng, 128)         # gallery dim (lane dim of the logits)

    budget, cap = _vmem_budget_and_cap()
    tq = _pick_tq(nq, ng_p, d_p, dk_p, out_isz, budget)
    tg = _pick_tg(ng_p, d_p, dk_p, budget)
    nq_p = _round_up(nq, tq)

    f32, bf16 = jnp.float32, jnp.bfloat16

    # Fold pos features into the encodes (kills the K=2 MXU pass); bf16 MXU
    # operands (accumulation stays f32 inside the kernels).
    # TODO(synk): pos_feat_q is produced by the SRNN + 2D-Gaussian sampling in
    # the original module; here it is supplied as an input.
    q_aug = _pad2d(jnp.concatenate([query_encode, pos_feat_q], axis=1).astype(bf16),
                   nq_p, dk_p)
    g_aug = _pad2d(jnp.concatenate([gallery_encode, pos_feat_g], axis=1).astype(bf16),
                   ng_p, dk_p)
    lbl_pad = _pad2d(gallery_label.astype(bf16), ng_p, ng_p)

    # Split the concat-then-linear emb into two pre-transposed padded weights:
    # [q|pq|0] @ W1_aug == q @ W[:, :D].T  and  [g|pg|0] @ W2_aug == g @ W[:, D:].T
    # (rows >= D of the augmented weights are zero).
    w = emb_weight.astype(f32)
    w1_aug = _pad2d(w[:, :d].T, dk_p, d_p).astype(bf16)
    w2_aug = _pad2d(w[:, d:].T, dk_p, d_p).astype(bf16)
    b_pad = _pad2d(emb_bias.astype(f32).reshape(1, d), 1, d_p)

    # Precomputed additive softmax mask row: 0 on real gallery cols, -1e30 on pad.
    mask_row = jnp.where(jnp.arange(ng_p) < ng, 0.0, -1e30).astype(f32).reshape(1, ng_p)

    # --- 1) Query-independent gallery fold (tiled over gallery blocks). -----
    fold_live = _fold_live_bytes(tg, ng_p, d_p, dk_p)
    fold_vmem = int(min(cap, max(32 * _MIB, int(1.5 * fold_live))))

    def build_fold(single):
        return pl.pallas_call(
            functools.partial(_gallery_fold_kernel, tg=tg),
            out_shape=(jax.ShapeDtypeStruct((dk_p, ng_p), bf16),
                       jax.ShapeDtypeStruct((ng_p, d_p), bf16)),
            grid_spec=pltpu.PrefetchScalarGridSpec(
                num_scalar_prefetch=0,
                grid=(ng_p // tg,),
                in_specs=[
                    pl.BlockSpec((ng_p, tg), lambda j: (0, j)),              # label cols
                    _resident_spec((ng_p, dk_p), lambda j: (0, 0), single),  # [g|pg]
                    _resident_spec((dk_p, d_p), lambda j: (0, 0), single),   # W2_aug
                ],
                out_specs=(pl.BlockSpec((dk_p, tg), lambda j: (0, j)),       # glT cols
                           pl.BlockSpec((tg, d_p), lambda j: (j, 0))),       # gw2 rows
            ),
            compiler_params=pltpu.CompilerParams(
                dimension_semantics=("parallel",),
                vmem_limit_bytes=fold_vmem),
        )

    glt, gw2 = _call_with_fallback(build_fold, (lbl_pad, g_aug, w2_aug))

    # --- 2) Attention + embed, tiled over query rows (megacore "parallel"). -
    attn_live = _attn_live_bytes(tq, ng_p, d_p, dk_p, out_isz)
    attn_vmem = int(min(cap, max(32 * _MIB, int(1.5 * attn_live))))

    def build_attn(single):
        return pl.pallas_call(
            _attn_embed_kernel,
            out_shape=jax.ShapeDtypeStruct((nq_p, d_p), out_dtype),
            grid_spec=pltpu.PrefetchScalarGridSpec(
                num_scalar_prefetch=0,
                grid=(nq_p // tq,),
                in_specs=[
                    pl.BlockSpec((tq, dk_p), lambda i: (i, 0)),               # q tile
                    _resident_spec((dk_p, ng_p), lambda i: (0, 0), single),   # glT
                    _resident_spec((ng_p, d_p), lambda i: (0, 0), single),    # gw2
                    _resident_spec((dk_p, d_p), lambda i: (0, 0), single),    # W1
                    _resident_spec((1, d_p), lambda i: (0, 0), single),       # bias
                    _resident_spec((1, ng_p), lambda i: (0, 0), single),      # mask
                ],
                out_specs=pl.BlockSpec((tq, d_p), lambda i: (i, 0)),
            ),
            compiler_params=pltpu.CompilerParams(
                dimension_semantics=("parallel",),
                vmem_limit_bytes=attn_vmem),
        )

    out_padded = _call_with_fallback(
        build_attn, (q_aug, glt, gw2, w1_aug, b_pad, mask_row))

    # TODO(synk): for galleries too large to keep glT/gw2 VMEM-resident even in
    # bf16, add an "arbitrary" grid axis over Ng with an online-softmax
    # accumulator instead of shrinking the query tile.
    return out_padded[:nq, :d]


# --------------------------------------------------------------------------
# Pure-JAX reference of the PyTorch forward (attention + emb path).
# --------------------------------------------------------------------------
def _reference(query_encode, gallery_encode, gallery_label,
               pos_feat_q, pos_feat_g, emb_weight, emb_bias):
    ip_pos = pos_feat_q @ pos_feat_g.T
    att_pos = ip_pos @ gallery_label
    ip = query_encode @ gallery_encode.T
    att = ip @ gallery_label
    att_all = att + att_pos
    sm = jax.nn.softmax(att_all, axis=1)
    r = sm @ gallery_encode
    x = jnp.concatenate([query_encode, r], axis=1)
    return jnp.tanh(x @ emb_weight.T + emb_bias)


if __name__ == "__main__":
    # Small shapes consistent with the forward: D=feat_dim, Nq queries, Ng
    # gallery items, square gallery_label (required by r = softmax @ gallery),
    # 2-D position features.  Moderate scales keep the softmax in a smooth
    # regime so the bf16-MXU kernel tracks the f32 reference closely.
    Nq, Ng, D, P = 24, 16, 48, 2
    key = jax.random.PRNGKey(0)
    ks = jax.random.split(key, 7)

    query_encode = 0.25 * jax.random.normal(ks[0], (Nq, D), dtype=jnp.float32)
    gallery_encode = 0.25 * jax.random.normal(ks[1], (Ng, D), dtype=jnp.float32)
    gallery_label = 0.5 * jax.random.normal(ks[2], (Ng, Ng), dtype=jnp.float32)
    pos_feat_q = 0.5 * jax.random.normal(ks[3], (Nq, P), dtype=jnp.float32)
    pos_feat_g = 0.5 * jax.random.normal(ks[4], (Ng, P), dtype=jnp.float32)

    # nn.Linear(2D -> D): weight (D, 2D), bias (D,).
    emb_weight = 0.05 * jax.random.normal(ks[5], (D, 2 * D), dtype=jnp.float32)
    emb_bias = 0.05 * jax.random.normal(ks[6], (D,), dtype=jnp.float32)

    out = attentional_embed(query_encode, gallery_encode, gallery_label,
                            pos_feat_q, pos_feat_g, emb_weight, emb_bias)
    out = jax.block_until_ready(out)

    ref = _reference(query_encode, gallery_encode, gallery_label,
                     pos_feat_q, pos_feat_g, emb_weight, emb_bias)
    assert out.shape == (Nq, D)
    err = float(jnp.max(jnp.abs(out - ref)))
    # bf16 MXU operands (f32 accumulation) + approx softmax reciprocal; the
    # tanh output is bounded in (-1, 1), so 2e-2 absolute is a meaningful
    # functional check with margin for bf16 rounding.
    assert err < 2e-2, err
    print("KERNEL_OK")
</pallas_src>

<mosaic_0001>
module attributes {stable_mosaic.version = 11 : i64} {
  func.func @_gallery_fold_kernel(%arg0: i32, %arg1: memref<128x128xbf16, #tpu.memory_space<vmem>>, %arg2: memref<128x128xbf16, #tpu.memory_space<vmem>>, %arg3: memref<128x128xbf16, #tpu.memory_space<vmem>>, %arg4: memref<128x128xbf16, #tpu.memory_space<vmem>>, %arg5: memref<128x128xbf16, #tpu.memory_space<vmem>>) attributes {dimension_semantics = [#tpu.dimension_semantics<parallel>], iteration_bounds = array<i64: 1>, scalar_prefetch = 0 : i64, scratch_operands = 0 : i64, tpu.core_type = #tpu.core_type<tc>, window_params = [{transform_indices = @transform_0, window_bounds = array<i64: 128, 128>}, {pipeline_mode = #tpu.pipeline_mode<synchronous>, transform_indices = @transform_1, window_bounds = array<i64: 128, 128>}, {pipeline_mode = #tpu.pipeline_mode<synchronous>, transform_indices = @transform_2, window_bounds = array<i64: 128, 128>}, {transform_indices = @transform_3, window_bounds = array<i64: 128, 128>}, {transform_indices = @transform_4, window_bounds = array<i64: 128, 128>}]} {
    %c0 = arith.constant 0 : index
    %c0_0 = arith.constant 0 : index
    %0 = vector.load %arg2[%c0, %c0_0] : memref<128x128xbf16, #tpu.memory_space<vmem>>, vector<128x128xbf16>
    %c0_1 = arith.constant 0 : index
    %c0_2 = arith.constant 0 : index
    %1 = vector.load %arg1[%c0_1, %c0_2] : memref<128x128xbf16, #tpu.memory_space<vmem>>, vector<128x128xbf16>
    %cst = arith.constant dense<0.000000e+00> : vector<128x128xf32>
    %2 = tpu.matmul %0, %1, %cst {dimension_numbers = #tpu.dot_dimension_numbers<[0], [0], [1], [1], [0, 1, 1, 1], [], []>} : vector<128x128xbf16>, vector<128x128xbf16>, vector<128x128xf32> -> vector<128x128xf32>
    %3 = arith.truncf %2 : vector<128x128xf32> to vector<128x128xbf16>
    %c0_3 = arith.constant 0 : index
    %c0_4 = arith.constant 0 : index
    %4 = vector.load %arg4[%c0_3, %c0_4] : memref<128x128xbf16, #tpu.memory_space<vmem>>, vector<128x128xbf16>
    tpu.vector_store %arg4[%c0_3, %c0_4], %3 {strides = array<i32>} : memref<128x128xbf16, #tpu.memory_space<vmem>>, vector<128x128xbf16>,
    %c128_i32 = arith.constant 128 : i32
    %5 = arith.muli %arg0, %c128_i32 : i32
    %6 = tpu.assume_multiple %5, 128 : i32
    %7 = arith.index_cast %6 : i32 to index
    %c0_5 = arith.constant 0 : index
    %8 = vector.load %arg2[%7, %c0_5] : memref<128x128xbf16, #tpu.memory_space<vmem>>, vector<128x128xbf16>
    %c0_6 = arith.constant 0 : index
    %c0_7 = arith.constant 0 : index
    %9 = vector.load %arg3[%c0_6, %c0_7] : memref<128x128xbf16, #tpu.memory_space<vmem>>, vector<128x128xbf16>
    %cst_8 = arith.constant dense<0.000000e+00> : vector<128x128xf32>
    %10 = tpu.matmul %8, %9, %cst_8 {dimension_numbers = #tpu.dot_dimension_numbers<[1], [0], [0], [1], [0, 0, 1, 1], [], []>} : vector<128x128xbf16>, vector<128x128xbf16>, vector<128x128xf32> -> vector<128x128xf32>
    %11 = arith.truncf %10 : vector<128x128xf32> to vector<128x128xbf16>
    %c0_9 = arith.constant 0 : index
    %c0_10 = arith.constant 0 : index
    %12 = vector.load %arg5[%c0_9, %c0_10] : memref<128x128xbf16, #tpu.memory_space<vmem>>, vector<128x128xbf16>
    tpu.vector_store %arg5[%c0_9, %c0_10], %11 {strides = array<i32>} : memref<128x128xbf16, #tpu.memory_space<vmem>>, vector<128x128xbf16>,
    return
  }
  func.func @transform_0(%arg0: i32) -> (i32, i32) {
    %c0_i32 = arith.constant 0 : i32
    %c0_i32_0 = arith.constant 0 : i32
    return %c0_i32, %arg0 : i32, i32
  }
  func.func @transform_1(%arg0: i32) -> (i32, i32) {
    %c0_i32 = arith.constant 0 : i32
    %c0_i32_0 = arith.constant 0 : i32
    %c0_i32_1 = arith.constant 0 : i32
    return %c0_i32, %c0_i32_0 : i32, i32
  }
  func.func @transform_2(%arg0: i32) -> (i32, i32) {
    %c0_i32 = arith.constant 0 : i32
    %c0_i32_0 = arith.constant 0 : i32
    %c0_i32_1 = arith.constant 0 : i32
    return %c0_i32, %c0_i32_0 : i32, i32
  }
  func.func @transform_3(%arg0: i32) -> (i32, i32) {
    %c0_i32 = arith.constant 0 : i32
    %c0_i32_0 = arith.constant 0 : i32
    return %c0_i32, %arg0 : i32, i32
  }
  func.func @transform_4(%arg0: i32) -> (i32, i32) {
    %c0_i32 = arith.constant 0 : i32
    %c0_i32_0 = arith.constant 0 : i32
    return %arg0, %c0_i32 : i32, i32
  }
}

module attributes {stable_mosaic.version = 11 : i64} {
  func.func @_gallery_fold_kernel(%arg0: i32, %arg1: memref<128x128xbf16, #tpu.memory_space<vmem>>, %arg2: memref<128x128xbf16, #tpu.memory_space<vmem>>, %arg3: memref<128x128xbf16, #tpu.memory_space<vmem>>, %arg4: memref<128x128xbf16, #tpu.memory_space<vmem>>, %arg5: memref<128x128xbf16, #tpu.memory_space<vmem>>) attributes {dimension_semantics = [#tpu.dimension_semantics<parallel>], iteration_bounds = array<i64: 1>, scalar_prefetch = 0 : i64, scratch_operands = 0 : i64, tpu.core_type = #tpu.core_type<tc>, window_params = [{transform_indices = @transform_0, window_bounds = array<i64: 128, 128>}, {pipeline_mode = #tpu.pipeline_mode<synchronous>, transform_indices = @transform_1, window_bounds = array<i64: 128, 128>}, {pipeline_mode = #tpu.pipeline_mode<synchronous>, transform_indices = @transform_2, window_bounds = array<i64: 128, 128>}, {transform_indices = @transform_3, window_bounds = array<i64: 128, 128>}, {transform_indices = @transform_4, window_bounds = array<i64: 128, 128>}]} {
    %c0 = arith.constant 0 : index
    %c0_0 = arith.constant 0 : index
    %0 = vector.load %arg2[%c0, %c0_0] : memref<128x128xbf16, #tpu.memory_space<vmem>>, vector<128x128xbf16>
    %c0_1 = arith.constant 0 : index
    %c0_2 = arith.constant 0 : index
    %1 = vector.load %arg1[%c0_1, %c0_2] : memref<128x128xbf16, #tpu.memory_space<vmem>>, vector<128x128xbf16>
    %cst = arith.constant dense<0.000000e+00> : vector<128x128xf32>
    %2 = tpu.matmul %0, %1, %cst {dimension_numbers = #tpu.dot_dimension_numbers<[0], [0], [1], [1], [0, 1, 1, 1], [], []>} : vector<128x128xbf16>, vector<128x128xbf16>, vector<128x128xf32> -> vector<128x128xf32>
    %3 = arith.truncf %2 : vector<128x128xf32> to vector<128x128xbf16>
    %c0_3 = arith.constant 0 : index
    %c0_4 = arith.constant 0 : index
    %4 = vector.load %arg4[%c0_3, %c0_4] : memref<128x128xbf16, #tpu.memory_space<vmem>>, vector<128x128xbf16>
    tpu.vector_store %arg4[%c0_3, %c0_4], %3 {strides = array<i32>} : memref<128x128xbf16, #tpu.memory_space<vmem>>, vector<128x128xbf16>,
    %c128_i32 = arith.constant 128 : i32
    %5 = arith.muli %arg0, %c128_i32 : i32
    %6 = tpu.assume_multiple %5, 128 : i32
    %7 = arith.index_cast %6 : i32 to index
    %c0_5 = arith.constant 0 : index
    %8 = vector.load %arg2[%7, %c0_5] : memref<128x128xbf16, #tpu.memory_space<vmem>>, vector<128x128xbf16>
    %c0_6 = arith.constant 0 : index
    %c0_7 = arith.constant 0 : index
    %9 = vector.load %arg3[%c0_6, %c0_7] : memref<128x128xbf16, #tpu.memory_space<vmem>>, vector<128x128xbf16>
    %cst_8 = arith.constant dense<0.000000e+00> : vector<128x128xf32>
    %10 = tpu.matmul %8, %9, %cst_8 {dimension_numbers = #tpu.dot_dimension_numbers<[1], [0], [0], [1], [0, 0, 1, 1], [], []>} : vector<128x128xbf16>, vector<128x128xbf16>, vector<128x128xf32> -> vector<128x128xf32>
    %11 = arith.truncf %10 : vector<128x128xf32> to vector<128x128xbf16>
    %c0_9 = arith.constant 0 : index
    %c0_10 = arith.constant 0 : index
    %12 = vector.load %arg5[%c0_9, %c0_10] : memref<128x128xbf16, #tpu.memory_space<vmem>>, vector<128x128xbf16>
    tpu.vector_store %arg5[%c0_9, %c0_10], %11 {strides = array<i32>} : memref<128x128xbf16, #tpu.memory_space<vmem>>, vector<128x128xbf16>,
    return
  }
  func.func @transform_0(%arg0: i32) -> (i32, i32) {
    %c0_i32 = arith.constant 0 : i32
    %c0_i32_0 = arith.constant 0 : i32
    return %c0_i32, %arg0 : i32, i32
  }
  func.func @transform_1(%arg0: i32) -> (i32, i32) {
    %c0_i32 = arith.constant 0 : i32
    %c0_i32_0 = arith.constant 0 : i32
    %c0_i32_1 = arith.constant 0 : i32
    return %c0_i32, %c0_i32_0 : i32, i32
  }
  func.func @transform_2(%arg0: i32) -> (i32, i32) {
    %c0_i32 = arith.constant 0 : i32
    %c0_i32_0 = arith.constant 0 : i32
    %c0_i32_1 = arith.constant 0 : i32
    return %c0_i32, %c0_i32_0 : i32, i32
  }
  func.func @transform_3(%arg0: i32) -> (i32, i32) {
    %c0_i32 = arith.constant 0 : i32
    %c0_i32_0 = arith.constant 0 : i32
    return %c0_i32, %arg0 : i32, i32
  }
  func.func @transform_4(%arg0: i32) -> (i32, i32) {
    %c0_i32 = arith.constant 0 : i32
    %c0_i32_0 = arith.constant 0 : i32
    return %arg0, %c0_i32 : i32, i32
  }
}

</mosaic_0001>

<llo_original>
// kernel: tpu_custom_call.1
$region0: #{tpu_custom_call.1}
  #allocation0 [shape = 'u32[]', space=smem, size = 0x4, offset = 0x4, fixed_abs, tag = 'smem constant byte address 0x4 - core index']
  #allocation1 [shape = 'u32[144,128]{1,0:T(1,128)}', space=vmem, size = 0x12000, scoped, tag = 'internal scratch']
  %s0 = inlined_call_operand.hbm [shape: bf16[128,128], index: 0, kind: input, shape index: {}]
  %s1 = inlined_call_operand.hbm [shape: bf16[128,128], index: 1, kind: input, shape index: {}]
  %s2 = inlined_call_operand.hbm [shape: bf16[128,128], index: 2, kind: input, shape index: {}]
  %s3 = inlined_call_operand.hbm [shape: bf16[128,128], index: 3, kind: output, shape index: {0}]
  %s4 = inlined_call_operand.hbm [shape: bf16[128,128], index: 4, kind: output, shape index: {1}]
  %5 = xla_tuple %s3, %s4
  %s6 = sld [smem:[#allocation0]]
  $region42: #{tpu_custom_call.1} parent=0
    _
  %s8 = ssub.s32 1, %s6
  %s9 = scalar_select 0, %s8, %s6
  $region1: #{tpu_custom_call.1} parent=0
    #allocation2 [shape = 'u8[32768]{0}', space=vmem, size = 0x8000, scoped, tag = 'input window, operand 0, single buffered']
    #allocation3 [shape = 's32[1]{0}', space=sflag, size = 0x4, scoped, tag = 'scoped memory for tpu_custom_call.1']
    #allocation4 [shape = 's32[1]{0}', space=sflag, size = 0x4, scoped, tag = 'scoped memory for tpu_custom_call.1']
    #allocation5 [shape = 'u8[32768]{0}', space=vmem, size = 0x8000, scoped, tag = 'input window, operand 1, single buffered']
    #allocation6 [shape = 's32[1]{0}', space=sflag, size = 0x4, scoped, tag = 'scoped memory for tpu_custom_call.1']
    #allocation7 [shape = 'u8[32768]{0}', space=vmem, size = 0x8000, scoped, tag = 'input window, operand 2, single buffered']
    #allocation8 [shape = 'u8[32768]{0}', space=vmem, size = 0x8000, scoped, tag = 'output window, operand 0, single buffered']
    #allocation9 [shape = 'u8[32768]{0}', space=vmem, size = 0x8000, scoped, tag = 'output window, operand 1, single buffered']
    #allocation10 [shape = 's32[1]{0}', space=sflag, size = 0x4, scoped, tag = 'scoped memory for tpu_custom_call.1']
    %10 = vsyncpa [#allocation3], 0
    %11 = vsyncpa [#allocation6], 0
    %12 = vsyncpa [#allocation4], 0
    %13 = vsyncpa [#allocation10], 0
    // Predicated region
    $region2: #{tpu_custom_call.1} parent=1 // pred_check
      _
    $region3: #{tpu_custom_call.1} parent=1 // pred_check_branch
      %15 = sbr.rel (0) target = $region5
    $region4: #{tpu_custom_call.1} parent=1 // pred_region
      %s17 = ssub.s32 1024, 1024
      %18 = vsyncadd [#allocation3], %s17
      %s19 = sshll.u32 [#allocation2], 4
      %s20 = int_to_ptr.vmem [resolvable:$true] %s19
      %25 = dma.hbm_to_vmem [thread:$0]  %s0, 1024, %s20, [#allocation3], 64, 64, 4
    $region5: #{tpu_custom_call.1} parent=1 // pred_fallthru
      _
    // Predicated region
    $region6: #{tpu_custom_call.1} parent=1 // pred_check
      _
    $region7: #{tpu_custom_call.1} parent=1 // pred_check_branch
      %27 = sbr.rel (0) target = $region9
    $region8: #{tpu_custom_call.1} parent=1 // pred_region
      %s29 = ssub.s32 1024, 1024
      %30 = vsyncadd [#allocation6], %s29
      %s31 = sshll.u32 [#allocation5], 4
      %s32 = int_to_ptr.vmem [resolvable:$true] %s31
      %37 = dma.hbm_to_vmem [thread:$0]  %s1, 1024, %s32, [#allocation6], 64, 64, 4
    $region9: #{tpu_custom_call.1} parent=1 // pred_fallthru
      _
    // Predicated region
    $region10: #{tpu_custom_call.1} parent=1 // pred_check
      _
    $region11: #{tpu_custom_call.1} parent=1 // pred_check_branch
      %39 = sbr.rel (0) target = $region13
    $region12: #{tpu_custom_call.1} parent=1 // pred_region
      %s41 = ssub.s32 1024, 1024
      %42 = vsyncadd [#allocation6], %s41
      %s43 = sshll.u32 [#allocation7], 4
      %s44 = int_to_ptr.vmem [resolvable:$true] %s43
      %49 = dma.hbm_to_vmem [thread:$0]  %s2, 1024, %s44, [#allocation6], 64, 64, 4
    $region13: #{tpu_custom_call.1} parent=1 // pred_fallthru
      _
    // Predicated region
    $region14: #{tpu_custom_call.1} parent=1 // pred_check
      _
    $region15: #{tpu_custom_call.1} parent=1 // pred_check_branch
      %51 = sbr.rel (0) target = $region17
    $region16: #{tpu_custom_call.1} parent=1 // pred_region
      %52 = dma.done [#allocation3], 1024
    $region17: #{tpu_custom_call.1} parent=1 // pred_fallthru
      _
    // Predicated region
    $region18: #{tpu_custom_call.1} parent=1 // pred_check
      _
    $region19: #{tpu_custom_call.1} parent=1 // pred_check_branch
      %54 = sbr.rel (0) target = $region21
    $region20: #{tpu_custom_call.1} parent=1 // pred_region
      %55 = dma.done [#allocation6], 1024
    $region21: #{tpu_custom_call.1} parent=1 // pred_fallthru
      _
    // Predicated region
    $region22: #{tpu_custom_call.1} parent=1 // pred_check
      _
    $region23: #{tpu_custom_call.1} parent=1 // pred_check_branch
      %57 = sbr.rel (0) target = $region25
    $region24: #{tpu_custom_call.1} parent=1 // pred_region
      %58 = dma.done [#allocation6], 1024
    $region25: #{tpu_custom_call.1} parent=1 // pred_fallthru
      _
    %v60 = vld [vmem:[#allocation5] sm:$0xf]
    %v61 = vld [vmem:[#allocation5 + $0x4] sm:$0xf]
    %v62 = vld [vmem:[#allocation5 + $0x8] sm:$0xf]
    %v63 = vld [vmem:[#allocation5 + $0xc] sm:$0xf]
    %v64 = vld [vmem:[#allocation5 + $0x10] sm:$0xf]
    %v65 = vld [vmem:[#allocation5 + $0x14] sm:$0xf]
    %v66 = vld [vmem:[#allocation5 + $0x18] sm:$0xf]
    %v67 = vld [vmem:[#allocation5 + $0x1c] sm:$0xf]
    %v68 = vld [vmem:[#allocation5 + $0x20] sm:$0xf]
    %v69 = vld [vmem:[#allocation5 + $0x24] sm:$0xf]
    %v70 = vld [vmem:[#allocation5 + $0x28] sm:$0xf]
    %v71 = vld [vmem:[#allocation5 + $0x2c] sm:$0xf]
    %v72 = vld [vmem:[#allocation5 + $0x30] sm:$0xf]
    %v73 = vld [vmem:[#allocation5 + $0x34] sm:$0xf]
    %v74 = vld [vmem:[#allocation5 + $0x38] sm:$0xf]
    %v75 = vld [vmem:[#allocation5 + $0x3c] sm:$0xf]
    %v76 = vld [vmem:[#allocation2] sm:$0xf]
    %v77 = vld [vmem:[#allocation2 + $0x4] sm:$0xf]
    %v78 = vld [vmem:[#allocation2 + $0x8] sm:$0xf]
    %v79 = vld [vmem:[#allocation2 + $0xc] sm:$0xf]
    %v80 = vld [vmem:[#allocation2 + $0x10] sm:$0xf]
    %v81 = vld [vmem:[#allocation2 + $0x14] sm:$0xf]
    %v82 = vld [vmem:[#allocation2 + $0x18] sm:$0xf]
    %v83 = vld [vmem:[#allocation2 + $0x1c] sm:$0xf]
    %v84 = vld [vmem:[#allocation2 + $0x20] sm:$0xf]
    %v85 = vld [vmem:[#allocation2 + $0x24] sm:$0xf]
    %v86 = vld [vmem:[#allocation2 + $0x28] sm:$0xf]
    %v87 = vld [vmem:[#allocation2 + $0x2c] sm:$0xf]
    %v88 = vld [vmem:[#allocation2 + $0x30] sm:$0xf]
    %v89 = vld [vmem:[#allocation2 + $0x34] sm:$0xf]
    %v90 = vld [vmem:[#allocation2 + $0x38] sm:$0xf]
    %v91 = vld [vmem:[#allocation2 + $0x3c] sm:$0xf]
    %v108 = vunpack.c.l.b16 %v60
    %v109 = vunpack.c.l.b16 %v61
    %v110 = vunpack.c.l.b16 %v62
    %v111 = vunpack.c.l.b16 %v63
    %v112 = vunpack.c.l.b16 %v64
    %v113 = vunpack.c.l.b16 %v65
    %v114 = vunpack.c.l.b16 %v66
    %v115 = vunpack.c.l.b16 %v67
    %v116 = vunpack.c.l.b16 %v68
    %v117 = vunpack.c.l.b16 %v69
    %v118 = vunpack.c.l.b16 %v70
    %v119 = vunpack.c.l.b16 %v71
    %v120 = vunpack.c.l.b16 %v72
    %v121 = vunpack.c.l.b16 %v73
    %v122 = vunpack.c.l.b16 %v74
    %v123 = vunpack.c.l.b16 %v75
    %v124 = vpack.c.b16 %v109, %v108
    %v125 = vpack.c.b16 %v111, %v110
    %v126 = vpack.c.b16 %v113, %v112
    %v127 = vpack.c.b16 %v115, %v114
    %v128 = vpack.c.b16 %v117, %v116
    %v129 = vpack.c.b16 %v119, %v118
    %v130 = vpack.c.b16 %v121, %v120
    %v131 = vpack.c.b16 %v123, %v122
    %140 = vxpose.xlu0.c.b16.start [1/8] %v124, 128
    %141 = vxpose.xlu0.c.b16.cont [2/8] %v125, 128
    %142 = vxpose.xlu0.c.b16.cont [3/8] %v126, 128
    %143 = vxpose.xlu0.c.b16.cont [4/8] %v127, 128
    %144 = vxpose.xlu0.c.b16.cont [5/8] %v128, 128
    %145 = vxpose.xlu0.c.b16.cont [6/8] %v129, 128
    %146 = vxpose.xlu0.c.b16.cont [7/8] %v130, 128
    %147 = vxpose.xlu0.c.b16.end [8/8] %v131, 128
    %v148 = vpop.trf.xlu0
    %v149 = vpop.trf.xlu0
    %v150 = vpop.trf.xlu0
    %v151 = vpop.trf.xlu0
    %v152 = vpop.trf.xlu0
    %v153 = vpop.trf.xlu0
    %v154 = vpop.trf.xlu0
    %v155 = vpop.trf.xlu0
    %v172 = vunpack.c.l.b16 %v76
    %v173 = vunpack.c.l.b16 %v77
    %v174 = vunpack.c.l.b16 %v78
    %v175 = vunpack.c.l.b16 %v79
    %v176 = vunpack.c.l.b16 %v80
    %v177 = vunpack.c.l.b16 %v81
    %v178 = vunpack.c.l.b16 %v82
    %v179 = vunpack.c.l.b16 %v83
    %v180 = vunpack.c.l.b16 %v84
    %v181 = vunpack.c.l.b16 %v85
    %v182 = vunpack.c.l.b16 %v86
    %v183 = vunpack.c.l.b16 %v87
    %v184 = vunpack.c.l.b16 %v88
    %v185 = vunpack.c.l.b16 %v89
    %v186 = vunpack.c.l.b16 %v90
    %v187 = vunpack.c.l.b16 %v91
    %v188 = vpack.c.b16 %v173, %v172
    %v189 = vpack.c.b16 %v175, %v174
    %v190 = vpack.c.b16 %v177, %v176
    %v191 = vpack.c.b16 %v179, %v178
    %v192 = vpack.c.b16 %v181, %v180
    %v193 = vpack.c.b16 %v183, %v182
    %v194 = vpack.c.b16 %v185, %v184
    %v195 = vpack.c.b16 %v187, %v186
    %204 = vmatprep.subr.bf16.mxu0 0
    %205 = vmatpush1.bf16.msra.mxu0 %v195
    %206 = vmatprep.subr.bf16.mxu0 0
    %207 = vmatpush1.bf16.msra.mxu0 %v194
    %208 = vmatprep.subr.bf16.mxu0 0
    %209 = vmatpush1.bf16.msra.mxu0 %v193
    %210 = vmatprep.subr.bf16.mxu0 0
    %211 = vmatpush1.bf16.msra.mxu0 %v192
    %212 = vmatprep.subr.bf16.mxu0 0
    %213 = vmatpush1.bf16.msra.mxu0 %v191
    %214 = vmatprep.subr.bf16.mxu0 0
    %215 = vmatpush1.bf16.msra.mxu0 %v190
    %216 = vmatprep.subr.bf16.mxu0 0
    %217 = vmatpush1.bf16.msra.mxu0 %v189
    %218 = vmatprep.subr.bf16.mxu0 0
    %219 = vmatpush1.bf16.msra.mxu0 %v188
    %220 = vmatprep.subr.bf16.mxu0 0
    %221 = vmatpush2.bf16.msra.mxu0 0
    %222 = vmatprep.subr.bf16.mxu0 0
    %223 = vmatpush2.bf16.msra.mxu0 0
    %224 = vmatprep.subr.bf16.mxu0 0
    %225 = vmatpush2.bf16.msra.mxu0 0
    %226 = vmatprep.subr.bf16.mxu0 0
    %227 = vmatpush2.bf16.msra.mxu0 0
    %228 = vmatprep.subr.bf16.mxu0 0
    %229 = vmatpush2.bf16.msra.mxu0 0
    %230 = vmatprep.subr.bf16.mxu0 0
    %231 = vmatpush2.bf16.msra.mxu0 0
    %232 = vmatprep.subr.bf16.mxu0 0
    %233 = vmatpush2.bf16.msra.mxu0 0
    %234 = vmatprep.subr.bf16.mxu0 0
    %235 = vmatpush2.bf16.msra.mxu0 0
    %236 = vmatprep.mubr.bf16.mxu0 0
    %237 = vmatmul.mubr.bf16.gmra.mxu0 %v148
    %v238 = vpop.f32.mrf.mxu0
    %v239 = vadd.f32 0.0, %v238
    %v240 = vpop.f32.mrf.mxu0
    %v241 = vpop.f32.mrf.mxu0
    %v242 = vadd.f32 0.0, %v241
    %v243 = vpop.f32.mrf.mxu0
    %244 = vmatprep.mubr.bf16.mxu0 0
    %245 = vmatmul.mubr.bf16.gmra.mxu0 %v149
    %v246 = vpop.f32.mrf.mxu0
    %v247 = vadd.f32 0.0, %v246
    %v248 = vpop.f32.mrf.mxu0
    %v249 = vpop.f32.mrf.mxu0
    %v250 = vadd.f32 0.0, %v249
    %v251 = vpop.f32.mrf.mxu0
    %252 = vmatprep.mubr.bf16.mxu0 0
    %253 = vmatmul.mubr.bf16.gmra.mxu0 %v150
    %v254 = vpop.f32.mrf.mxu0
    %v255 = vadd.f32 0.0, %v254
    %v256 = vpop.f32.mrf.mxu0
    %v257 = vpop.f32.mrf.mxu0
    %v258 = vadd.f32 0.0, %v257
    %v259 = vpop.f32.mrf.mxu0
    %260 = vmatprep.mubr.bf16.mxu0 0
    %261 = vmatmul.mubr.bf16.gmra.mxu0 %v151
    %v262 = vpop.f32.mrf.mxu0
    %v263 = vadd.f32 0.0, %v262
    %v264 = vpop.f32.mrf.mxu0
    %v265 = vpop.f32.mrf.mxu0
    %v266 = vadd.f32 0.0, %v265
    %v267 = vpop.f32.mrf.mxu0
    %268 = vmatprep.mubr.bf16.mxu0 0
    %269 = vmatmul.mubr.bf16.gmra.mxu0 %v152
    %v270 = vpop.f32.mrf.mxu0
    %v271 = vadd.f32 0.0, %v270
    %v272 = vpop.f32.mrf.mxu0
    %v273 = vpop.f32.mrf.mxu0
    %v274 = vadd.f32 0.0, %v273
    %v275 = vpop.f32.mrf.mxu0
    %276 = vmatprep.mubr.bf16.mxu0 0
    %277 = vmatmul.mubr.bf16.gmra.mxu0 %v153
    %v278 = vpop.f32.mrf.mxu0
    %v279 = vadd.f32 0.0, %v278
    %v280 = vpop.f32.mrf.mxu0
    %v281 = vpop.f32.mrf.mxu0
    %v282 = vadd.f32 0.0, %v281
    %v283 = vpop.f32.mrf.mxu0
    %284 = vmatprep.mubr.bf16.mxu0 0
    %285 = vmatmul.mubr.bf16.gmra.mxu0 %v154
    %v286 = vpop.f32.mrf.mxu0
    %v287 = vadd.f32 0.0, %v286
    %v288 = vpop.f32.mrf.mxu0
    %v289 = vpop.f32.mrf.mxu0
    %v290 = vadd.f32 0.0, %v289
    %v291 = vpop.f32.mrf.mxu0
    %292 = vmatprep.mubr.bf16.mxu0 0
    %293 = vmatmul.mubr.bf16.gmra.mxu0 %v155
    %v294 = vpop.f32.mrf.mxu0
    %v295 = vadd.f32 0.0, %v294
    %v296 = vpop.f32.mrf.mxu0
    %v297 = vpop.f32.mrf.mxu0
    %v298 = vadd.f32 0.0, %v297
    %v299 = vpop.f32.mrf.mxu0
    %300 = vdwg.mxu0
    %v301 = vpack.c.bf16 %v242, %v239
    %v302 = vpack.c.bf16 %v250, %v247
    %v303 = vpack.c.bf16 %v258, %v255
    %v304 = vpack.c.bf16 %v266, %v263
    %v305 = vpack.c.bf16 %v274, %v271
    %v306 = vpack.c.bf16 %v282, %v279
    %v307 = vpack.c.bf16 %v290, %v287
    %v308 = vpack.c.bf16 %v298, %v295
    %v317 = vunpack.c.l.b16 %v301
    %v318 = vunpack.c.h.b16 %v301
    %v319 = vunpack.c.l.b16 %v302
    %v320 = vunpack.c.h.b16 %v302
    %v321 = vunpack.c.l.b16 %v303
    %v322 = vunpack.c.h.b16 %v303
    %v323 = vunpack.c.l.b16 %v304
    %v324 = vunpack.c.h.b16 %v304
    %v325 = vunpack.c.l.b16 %v305
    %v326 = vunpack.c.h.b16 %v305
    %v327 = vunpack.c.l.b16 %v306
    %v328 = vunpack.c.h.b16 %v306
    %v329 = vunpack.c.l.b16 %v307
    %v330 = vunpack.c.h.b16 %v307
    %v331 = vunpack.c.l.b16 %v308
    %v332 = vunpack.c.h.b16 %v308
    %v333 = vpack.c.b16 %v317, %v317
    %v334 = vpack.c.b16 %v318, %v318
    %v335 = vpack.c.b16 %v319, %v319
    %v336 = vpack.c.b16 %v320, %v320
    %v337 = vpack.c.b16 %v321, %v321
    %v338 = vpack.c.b16 %v322, %v322
    %v339 = vpack.c.b16 %v323, %v323
    %v340 = vpack.c.b16 %v324, %v324
    %v341 = vpack.c.b16 %v325, %v325
    %v342 = vpack.c.b16 %v326, %v326
    %v343 = vpack.c.b16 %v327, %v327
    %v344 = vpack.c.b16 %v328, %v328
    %v345 = vpack.c.b16 %v329, %v329
    %v346 = vpack.c.b16 %v330, %v330
    %v347 = vpack.c.b16 %v331, %v331
    %v348 = vpack.c.b16 %v332, %v332
    %365 = vst [vmem:[#allocation8] sm:$0xf] %v333
    %366 = vst [vmem:[#allocation8 + $0x4] sm:$0xf] %v334
    %367 = vst [vmem:[#allocation8 + $0x8] sm:$0xf] %v335
    %368 = vst [vmem:[#allocation8 + $0xc] sm:$0xf] %v336
    %369 = vst [vmem:[#allocation8 + $0x10] sm:$0xf] %v337
    %370 = vst [vmem:[#allocation8 + $0x14] sm:$0xf] %v338
    %371 = vst [vmem:[#allocation8 + $0x18] sm:$0xf] %v339
    %372 = vst [vmem:[#allocation8 + $0x1c] sm:$0xf] %v340
    %373 = vst [vmem:[#allocation8 + $0x20] sm:$0xf] %v341
    %374 = vst [vmem:[#allocation8 + $0x24] sm:$0xf] %v342
    %375 = vst [vmem:[#allocation8 + $0x28] sm:$0xf] %v343
    %376 = vst [vmem:[#allocation8 + $0x2c] sm:$0xf] %v344
    %377 = vst [vmem:[#allocation8 + $0x30] sm:$0xf] %v345
    %378 = vst [vmem:[#allocation8 + $0x34] sm:$0xf] %v346
    %379 = vst [vmem:[#allocation8 + $0x38] sm:$0xf] %v347
    %380 = vst [vmem:[#allocation8 + $0x3c] sm:$0xf] %v348
    %s381 = smul.u32 0, 128
    %s382 = sshra.s32 %s381, 3
    %s383 = sand.u32 %s381, 7
    %s384 = smul.addr %s382, 4
    %s385 = scalar_lea.vmem [#allocation5], %s384
    %v386 = vld [vmem:[%s385] sm:$0xf]
    %v387 = vld [vmem:[%s385 + $0x4] sm:$0xf]
    %v388 = vld [vmem:[%s385 + $0x8] sm:$0xf]
    %v389 = vld [vmem:[%s385 + $0xc] sm:$0xf]
    %v390 = vld [vmem:[%s385 + $0x10] sm:$0xf]
    %v391 = vld [vmem:[%s385 + $0x14] sm:$0xf]
    %v392 = vld [vmem:[%s385 + $0x18] sm:$0xf]
    %v393 = vld [vmem:[%s385 + $0x1c] sm:$0xf]
    %v394 = vld [vmem:[%s385 + $0x20] sm:$0xf]
    %v395 = vld [vmem:[%s385 + $0x24] sm:$0xf]
    %v396 = vld [vmem:[%s385 + $0x28] sm:$0xf]
    %v397 = vld [vmem:[%s385 + $0x2c] sm:$0xf]
    %v398 = vld [vmem:[%s385 + $0x30] sm:$0xf]
    %v399 = vld [vmem:[%s385 + $0x34] sm:$0xf]
    %v400 = vld [vmem:[%s385 + $0x38] sm:$0xf]
    %v401 = vld [vmem:[%s385 + $0x3c] sm:$0xf]
    %v402 = vld [vmem:[#allocation7] sm:$0xf]
    %v403 = vld [vmem:[#allocation7 + $0x4] sm:$0xf]
    %v404 = vld [vmem:[#allocation7 + $0x8] sm:$0xf]
    %v405 = vld [vmem:[#allocation7 + $0xc] sm:$0xf]
    %v406 = vld [vmem:[#allocation7 + $0x10] sm:$0xf]
    %v407 = vld [vmem:[#allocation7 + $0x14] sm:$0xf]
    %v408 = vld [vmem:[#allocation7 + $0x18] sm:$0xf]
    %v409 = vld [vmem:[#allocation7 + $0x1c] sm:$0xf]
    %v410 = vld [vmem:[#allocation7 + $0x20] sm:$0xf]
    %v411 = vld [vmem:[#allocation7 + $0x24] sm:$0xf]
    %v412 = vld [vmem:[#allocation7 + $0x28] sm:$0xf]
    %v413 = vld [vmem:[#allocation7 + $0x2c] sm:$0xf]
    %v414 = vld [vmem:[#allocation7 + $0x30] sm:$0xf]
    %v415 = vld [vmem:[#allocation7 + $0x34] sm:$0xf]
    %v416 = vld [vmem:[#allocation7 + $0x38] sm:$0xf]
    %v417 = vld [vmem:[#allocation7 + $0x3c] sm:$0xf]
    %v434 = vunpack.c.l.b16 %v386
    %v435 = vunpack.c.l.b16 %v387
    %v436 = vunpack.c.l.b16 %v388
    %v437 = vunpack.c.l.b16 %v389
    %v438 = vunpack.c.l.b16 %v390
    %v439 = vunpack.c.l.b16 %v391
    %v440 = vunpack.c.l.b16 %v392
    %v441 = vunpack.c.l.b16 %v393
    %v442 = vunpack.c.l.b16 %v394
    %v443 = vunpack.c.l.b16 %v395
    %v444 = vunpack.c.l.b16 %v396
    %v445 = vunpack.c.l.b16 %v397
    %v446 = vunpack.c.l.b16 %v398
    %v447 = vunpack.c.l.b16 %v399
    %v448 = vunpack.c.l.b16 %v400
    %v449 = vunpack.c.l.b16 %v401
    %v450 = vpack.c.b16 %v435, %v434
    %v451 = vpack.c.b16 %v437, %v436
    %v452 = vpack.c.b16 %v439, %v438
    %v453 = vpack.c.b16 %v441, %v440
    %v454 = vpack.c.b16 %v443, %v442
    %v455 = vpack.c.b16 %v445, %v444
    %v456 = vpack.c.b16 %v447, %v446
    %v457 = vpack.c.b16 %v449, %v448
    %v482 = vunpack.c.l.b16 %v402
    %v483 = vunpack.c.l.b16 %v403
    %v484 = vunpack.c.l.b16 %v404
    %v485 = vunpack.c.l.b16 %v405
    %v486 = vunpack.c.l.b16 %v406
    %v487 = vunpack.c.l.b16 %v407
    %v488 = vunpack.c.l.b16 %v408
    %v489 = vunpack.c.l.b16 %v409
    %v490 = vunpack.c.l.b16 %v410
    %v491 = vunpack.c.l.b16 %v411
    %v492 = vunpack.c.l.b16 %v412
    %v493 = vunpack.c.l.b16 %v413
    %v494 = vunpack.c.l.b16 %v414
    %v495 = vunpack.c.l.b16 %v415
    %v496 = vunpack.c.l.b16 %v416
    %v497 = vunpack.c.l.b16 %v417
    %v498 = vpack.c.b16 %v483, %v482
    %v499 = vpack.c.b16 %v485, %v484
    %v500 = vpack.c.b16 %v487, %v486
    %v501 = vpack.c.b16 %v489, %v488
    %v502 = vpack.c.b16 %v491, %v490
    %v503 = vpack.c.b16 %v493, %v492
    %v504 = vpack.c.b16 %v495, %v494
    %v505 = vpack.c.b16 %v497, %v496
    %514 = vmatprep.subr.bf16.mxu0 0
    %515 = vmatpush1.bf16.msra.mxu0 %v505
    %516 = vmatprep.subr.bf16.mxu0 0
    %517 = vmatpush1.bf16.msra.mxu0 %v504
    %518 = vmatprep.subr.bf16.mxu0 0
    %519 = vmatpush1.bf16.msra.mxu0 %v503
    %520 = vmatprep.subr.bf16.mxu0 0
    %521 = vmatpush1.bf16.msra.mxu0 %v502
    %522 = vmatprep.subr.bf16.mxu0 0
    %523 = vmatpush1.bf16.msra.mxu0 %v501
    %524 = vmatprep.subr.bf16.mxu0 0
    %525 = vmatpush1.bf16.msra.mxu0 %v500
    %526 = vmatprep.subr.bf16.mxu0 0
    %527 = vmatpush1.bf16.msra.mxu0 %v499
    %528 = vmatprep.subr.bf16.mxu0 0
    %529 = vmatpush1.bf16.msra.mxu0 %v498
    %530 = vmatprep.subr.bf16.mxu0 0
    %531 = vmatpush2.bf16.msra.mxu0 0
    %532 = vmatprep.subr.bf16.mxu0 0
    %533 = vmatpush2.bf16.msra.mxu0 0
    %534 = vmatprep.subr.bf16.mxu0 0
    %535 = vmatpush2.bf16.msra.mxu0 0
    %536 = vmatprep.subr.bf16.mxu0 0
    %537 = vmatpush2.bf16.msra.mxu0 0
    %538 = vmatprep.subr.bf16.mxu0 0
    %539 = vmatpush2.bf16.msra.mxu0 0
    %540 = vmatprep.subr.bf16.mxu0 0
    %541 = vmatpush2.bf16.msra.mxu0 0
    %542 = vmatprep.subr.bf16.mxu0 0
    %543 = vmatpush2.bf16.msra.mxu0 0
    %544 = vmatprep.subr.bf16.mxu0 0
    %545 = vmatpush2.bf16.msra.mxu0 0
    %546 = vmatprep.mubr.bf16.mxu0 0
    %547 = vmatmul.mubr.bf16.gmra.mxu0 %v450
    %v548 = vpop.f32.mrf.mxu0
    %v549 = vadd.f32 0.0, %v548
    %v550 = vpop.f32.mrf.mxu0
    %v551 = vpop.f32.mrf.mxu0
    %v552 = vadd.f32 0.0, %v551
    %v553 = vpop.f32.mrf.mxu0
    %554 = vmatprep.mubr.bf16.mxu0 0
    %555 = vmatmul.mubr.bf16.gmra.mxu0 %v451
    %v556 = vpop.f32.mrf.mxu0
    %v557 = vadd.f32 0.0, %v556
    %v558 = vpop.f32.mrf.mxu0
    %v559 = vpop.f32.mrf.mxu0
    %v560 = vadd.f32 0.0, %v559
    %v561 = vpop.f32.mrf.mxu0
    %562 = vmatprep.mubr.bf16.mxu0 0
    %563 = vmatmul.mubr.bf16.gmra.mxu0 %v452
    %v564 = vpop.f32.mrf.mxu0
    %v565 = vadd.f32 0.0, %v564
    %v566 = vpop.f32.mrf.mxu0
    %v567 = vpop.f32.mrf.mxu0
    %v568 = vadd.f32 0.0, %v567
    %v569 = vpop.f32.mrf.mxu0
    %570 = vmatprep.mubr.bf16.mxu0 0
    %571 = vmatmul.mubr.bf16.gmra.mxu0 %v453
    %v572 = vpop.f32.mrf.mxu0
    %v573 = vadd.f32 0.0, %v572
    %v574 = vpop.f32.mrf.mxu0
    %v575 = vpop.f32.mrf.mxu0
    %v576 = vadd.f32 0.0, %v575
    %v577 = vpop.f32.mrf.mxu0
    %578 = vmatprep.mubr.bf16.mxu0 0
    %579 = vmatmul.mubr.bf16.gmra.mxu0 %v454
    %v580 = vpop.f32.mrf.mxu0
    %v581 = vadd.f32 0.0, %v580
    %v582 = vpop.f32.mrf.mxu0
    %v583 = vpop.f32.mrf.mxu0
    %v584 = vadd.f32 0.0, %v583
    %v585 = vpop.f32.mrf.mxu0
    %586 = vmatprep.mubr.bf16.mxu0 0
    %587 = vmatmul.mubr.bf16.gmra.mxu0 %v455
    %v588 = vpop.f32.mrf.mxu0
    %v589 = vadd.f32 0.0, %v588
    %v590 = vpop.f32.mrf.mxu0
    %v591 = vpop.f32.mrf.mxu0
    %v592 = vadd.f32 0.0, %v591
    %v593 = vpop.f32.mrf.mxu0
    %594 = vmatprep.mubr.bf16.mxu0 0
    %595 = vmatmul.mubr.bf16.gmra.mxu0 %v456
    %v596 = vpop.f32.mrf.mxu0
    %v597 = vadd.f32 0.0, %v596
    %v598 = vpop.f32.mrf.mxu0
    %v599 = vpop.f32.mrf.mxu0
    %v600 = vadd.f32 0.0, %v599
    %v601 = vpop.f32.mrf.mxu0
    %602 = vmatprep.mubr.bf16.mxu0 0
    %603 = vmatmul.mubr.bf16.gmra.mxu0 %v457
    %v604 = vpop.f32.mrf.mxu0
    %v605 = vadd.f32 0.0, %v604
    %v606 = vpop.f32.mrf.mxu0
    %v607 = vpop.f32.mrf.mxu0
    %v608 = vadd.f32 0.0, %v607
    %v609 = vpop.f32.mrf.mxu0
    %610 = vdwg.mxu0
    %v611 = vpack.c.bf16 %v552, %v549
    %v612 = vpack.c.bf16 %v560, %v557
    %v613 = vpack.c.bf16 %v568, %v565
    %v614 = vpack.c.bf16 %v576, %v573
    %v615 = vpack.c.bf16 %v584, %v581
    %v616 = vpack.c.bf16 %v592, %v589
    %v617 = vpack.c.bf16 %v600, %v597
    %v618 = vpack.c.bf16 %v608, %v605
    %v627 = vunpack.c.l.b16 %v611
    %v628 = vunpack.c.h.b16 %v611
    %v629 = vunpack.c.l.b16 %v612
    %v630 = vunpack.c.h.b16 %v612
    %v631 = vunpack.c.l.b16 %v613
    %v632 = vunpack.c.h.b16 %v613
    %v633 = vunpack.c.l.b16 %v614
    %v634 = vunpack.c.h.b16 %v614
    %v635 = vunpack.c.l.b16 %v615
    %v636 = vunpack.c.h.b16 %v615
    %v637 = vunpack.c.l.b16 %v616
    %v638 = vunpack.c.h.b16 %v616
    %v639 = vunpack.c.l.b16 %v617
    %v640 = vunpack.c.h.b16 %v617
    %v641 = vunpack.c.l.b16 %v618
    %v642 = vunpack.c.h.b16 %v618
    %v643 = vpack.c.b16 %v627, %v627
    %v644 = vpack.c.b16 %v628, %v628
    %v645 = vpack.c.b16 %v629, %v629
    %v646 = vpack.c.b16 %v630, %v630
    %v647 = vpack.c.b16 %v631, %v631
    %v648 = vpack.c.b16 %v632, %v632
    %v649 = vpack.c.b16 %v633, %v633
    %v650 = vpack.c.b16 %v634, %v634
    %v651 = vpack.c.b16 %v635, %v635
    %v652 = vpack.c.b16 %v636, %v636
    %v653 = vpack.c.b16 %v637, %v637
    %v654 = vpack.c.b16 %v638, %v638
    %v655 = vpack.c.b16 %v639, %v639
    %v656 = vpack.c.b16 %v640, %v640
    %v657 = vpack.c.b16 %v641, %v641
    %v658 = vpack.c.b16 %v642, %v642
    %675 = vst [vmem:[#allocation9] sm:$0xf] %v643
    %676 = vst [vmem:[#allocation9 + $0x4] sm:$0xf] %v644
    %677 = vst [vmem:[#allocation9 + $0x8] sm:$0xf] %v645
    %678 = vst [vmem:[#allocation9 + $0xc] sm:$0xf] %v646
    %679 = vst [vmem:[#allocation9 + $0x10] sm:$0xf] %v647
    %680 = vst [vmem:[#allocation9 + $0x14] sm:$0xf] %v648
    %681 = vst [vmem:[#allocation9 + $0x18] sm:$0xf] %v649
    %682 = vst [vmem:[#allocation9 + $0x1c] sm:$0xf] %v650
    %683 = vst [vmem:[#allocation9 + $0x20] sm:$0xf] %v651
    %684 = vst [vmem:[#allocation9 + $0x24] sm:$0xf] %v652
    %685 = vst [vmem:[#allocation9 + $0x28] sm:$0xf] %v653
    %686 = vst [vmem:[#allocation9 + $0x2c] sm:$0xf] %v654
    %687 = vst [vmem:[#allocation9 + $0x30] sm:$0xf] %v655
    %688 = vst [vmem:[#allocation9 + $0x34] sm:$0xf] %v656
    %689 = vst [vmem:[#allocation9 + $0x38] sm:$0xf] %v657
    %690 = vst [vmem:[#allocation9 + $0x3c] sm:$0xf] %v658
    // Predicated region
    $region26: #{tpu_custom_call.1} parent=1 // pred_check
      _
    $region27: #{tpu_custom_call.1} parent=1 // pred_check_branch
      %692 = sbr.rel (0) target = $region29
    $region28: #{tpu_custom_call.1} parent=1 // pred_region
      %s694 = ssub.s32 1024, 1024
      %695 = vsyncadd [#allocation4], %s694
      %s696 = sshll.u32 [#allocation8], 4
      %s697 = int_to_ptr.vmem [resolvable:$true] %s696
      %702 = dma.vmem_to_hbm [thread:$0]  %s697, 1024, %s3, [#allocation4], 64, 64, 4
    $region29: #{tpu_custom_call.1} parent=1 // pred_fallthru
      _
    // Predicated region
    $region30: #{tpu_custom_call.1} parent=1 // pred_check
      _
    $region31: #{tpu_custom_call.1} parent=1 // pred_check_branch
      %704 = sbr.rel (0) target = $region33
    $region32: #{tpu_custom_call.1} parent=1 // pred_region
      %s706 = ssub.s32 1024, 1024
      %707 = vsyncadd [#allocation10], %s706
      %s708 = sshll.u32 [#allocation9], 4
      %s709 = int_to_ptr.vmem [resolvable:$true] %s708
      %714 = dma.vmem_to_hbm [thread:$0]  %s709, 1024, %s4, [#allocation10], 64, 64, 4
    $region33: #{tpu_custom_call.1} parent=1 // pred_fallthru
      _
    // Predicated region
    $region34: #{tpu_custom_call.1} parent=1 // pred_check
      _
    $region35: #{tpu_custom_call.1} parent=1 // pred_check_branch
      %716 = sbr.rel (0) target = $region37
    $region36: #{tpu_custom_call.1} parent=1 // pred_region
      %717 = dma.done [#allocation4], 1024
    $region37: #{tpu_custom_call.1} parent=1 // pred_fallthru
      _
    // Predicated region
    $region38: #{tpu_custom_call.1} parent=1 // pred_check
      _
    $region39: #{tpu_custom_call.1} parent=1 // pred_check_branch
      %719 = sbr.rel (0) target = $region41
    $region40: #{tpu_custom_call.1} parent=1 // pred_region
      %720 = dma.done [#allocation10], 1024
    $region41: #{tpu_custom_call.1} parent=1 // pred_fallthru
      _
    %721 = vsyncpa [#allocation3], 1
    %722 = vsyncpa [#allocation6], 1
    %723 = vsyncpa [#allocation4], 1
    %724 = vsyncpa [#allocation10], 1

// kernel: tpu_custom_call.1
$region0: #{tpu_custom_call.1}
  #allocation0 [shape = 'u32[]', space=smem, size = 0x4, offset = 0x4, fixed_abs, tag = 'smem constant byte address 0x4 - core index']
  #allocation1 [shape = 'u32[144,128]{1,0:T(1,128)}', space=vmem, size = 0x12000, scoped, tag = 'internal scratch']
  %s0 = inlined_call_operand.hbm [shape: bf16[128,128], index: 0, kind: input, shape index: {}]
  %s1 = inlined_call_operand.hbm [shape: bf16[128,128], index: 1, kind: input, shape index: {}]
  %s2 = inlined_call_operand.hbm [shape: bf16[128,128], index: 2, kind: input, shape index: {}]
  %s3 = inlined_call_operand.hbm [shape: bf16[128,128], index: 3, kind: output, shape index: {0}]
  %s4 = inlined_call_operand.hbm [shape: bf16[128,128], index: 4, kind: output, shape index: {1}]
  %5 = xla_tuple %s3, %s4
  %s6 = sld [smem:[#allocation0]]
  $region42: #{tpu_custom_call.1} parent=0
    _
  %s8 = ssub.s32 1, %s6
  %s9 = scalar_select 0, %s8, %s6
  $region1: #{tpu_custom_call.1} parent=0
    #allocation2 [shape = 'u8[32768]{0}', space=vmem, size = 0x8000, scoped, tag = 'input window, operand 0, single buffered']
    #allocation3 [shape = 's32[1]{0}', space=sflag, size = 0x4, scoped, tag = 'scoped memory for tpu_custom_call.1']
    #allocation4 [shape = 's32[1]{0}', space=sflag, size = 0x4, scoped, tag = 'scoped memory for tpu_custom_call.1']
    #allocation5 [shape = 'u8[32768]{0}', space=vmem, size = 0x8000, scoped, tag = 'input window, operand 1, single buffered']
    #allocation6 [shape = 's32[1]{0}', space=sflag, size = 0x4, scoped, tag = 'scoped memory for tpu_custom_call.1']
    #allocation7 [shape = 'u8[32768]{0}', space=vmem, size = 0x8000, scoped, tag = 'input window, operand 2, single buffered']
    #allocation8 [shape = 'u8[32768]{0}', space=vmem, size = 0x8000, scoped, tag = 'output window, operand 0, single buffered']
    #allocation9 [shape = 'u8[32768]{0}', space=vmem, size = 0x8000, scoped, tag = 'output window, operand 1, single buffered']
    #allocation10 [shape = 's32[1]{0}', space=sflag, size = 0x4, scoped, tag = 'scoped memory for tpu_custom_call.1']
    %10 = vsyncpa [#allocation3], 0
    %11 = vsyncpa [#allocation6], 0
    %12 = vsyncpa [#allocation4], 0
    %13 = vsyncpa [#allocation10], 0
    // Predicated region
    $region2: #{tpu_custom_call.1} parent=1 // pred_check
      _
    $region3: #{tpu_custom_call.1} parent=1 // pred_check_branch
      %15 = sbr.rel (0) target = $region5
    $region4: #{tpu_custom_call.1} parent=1 // pred_region
      %s17 = ssub.s32 1024, 1024
      %18 = vsyncadd [#allocation3], %s17
      %s19 = sshll.u32 [#allocation2], 4
      %s20 = int_to_ptr.vmem [resolvable:$true] %s19
      %25 = dma.hbm_to_vmem [thread:$0]  %s0, 1024, %s20, [#allocation3], 64, 64, 4
    $region5: #{tpu_custom_call.1} parent=1 // pred_fallthru
      _
    // Predicated region
    $region6: #{tpu_custom_call.1} parent=1 // pred_check
      _
    $region7: #{tpu_custom_call.1} parent=1 // pred_check_branch
      %27 = sbr.rel (0) target = $region9
    $region8: #{tpu_custom_call.1} parent=1 // pred_region
      %s29 = ssub.s32 1024, 1024
      %30 = vsyncadd [#allocation6], %s29
      %s31 = sshll.u32 [#allocation5], 4
      %s32 = int_to_ptr.vmem [resolvable:$true] %s31
      %37 = dma.hbm_to_vmem [thread:$0]  %s1, 1024, %s32, [#allocation6], 64, 64, 4
    $region9: #{tpu_custom_call.1} parent=1 // pred_fallthru
      _
    // Predicated region
    $region10: #{tpu_custom_call.1} parent=1 // pred_check
      _
    $region11: #{tpu_custom_call.1} parent=1 // pred_check_branch
      %39 = sbr.rel (0) target = $region13
    $region12: #{tpu_custom_call.1} parent=1 // pred_region
      %s41 = ssub.s32 1024, 1024
      %42 = vsyncadd [#allocation6], %s41
      %s43 = sshll.u32 [#allocation7], 4
      %s44 = int_to_ptr.vmem [resolvable:$true] %s43
      %49 = dma.hbm_to_vmem [thread:$0]  %s2, 1024, %s44, [#allocation6], 64, 64, 4
    $region13: #{tpu_custom_call.1} parent=1 // pred_fallthru
      _
    // Predicated region
    $region14: #{tpu_custom_call.1} parent=1 // pred_check
      _
    $region15: #{tpu_custom_call.1} parent=1 // pred_check_branch
      %51 = sbr.rel (0) target = $region17
    $region16: #{tpu_custom_call.1} parent=1 // pred_region
      %52 = dma.done [#allocation3], 1024
    $region17: #{tpu_custom_call.1} parent=1 // pred_fallthru
      _
    // Predicated region
    $region18: #{tpu_custom_call.1} parent=1 // pred_check
      _
    $region19: #{tpu_custom_call.1} parent=1 // pred_check_branch
      %54 = sbr.rel (0) target = $region21
    $region20: #{tpu_custom_call.1} parent=1 // pred_region
      %55 = dma.done [#allocation6], 1024
    $region21: #{tpu_custom_call.1} parent=1 // pred_fallthru
      _
    // Predicated region
    $region22: #{tpu_custom_call.1} parent=1 // pred_check
      _
    $region23: #{tpu_custom_call.1} parent=1 // pred_check_branch
      %57 = sbr.rel (0) target = $region25
    $region24: #{tpu_custom_call.1} parent=1 // pred_region
      %58 = dma.done [#allocation6], 1024
    $region25: #{tpu_custom_call.1} parent=1 // pred_fallthru
      _
    %v60 = vld [vmem:[#allocation5] sm:$0xf]
    %v61 = vld [vmem:[#allocation5 + $0x4] sm:$0xf]
    %v62 = vld [vmem:[#allocation5 + $0x8] sm:$0xf]
    %v63 = vld [vmem:[#allocation5 + $0xc] sm:$0xf]
    %v64 = vld [vmem:[#allocation5 + $0x10] sm:$0xf]
    %v65 = vld [vmem:[#allocation5 + $0x14] sm:$0xf]
    %v66 = vld [vmem:[#allocation5 + $0x18] sm:$0xf]
    %v67 = vld [vmem:[#allocation5 + $0x1c] sm:$0xf]
    %v68 = vld [vmem:[#allocation5 + $0x20] sm:$0xf]
    %v69 = vld [vmem:[#allocation5 + $0x24] sm:$0xf]
    %v70 = vld [vmem:[#allocation5 + $0x28] sm:$0xf]
    %v71 = vld [vmem:[#allocation5 + $0x2c] sm:$0xf]
    %v72 = vld [vmem:[#allocation5 + $0x30] sm:$0xf]
    %v73 = vld [vmem:[#allocation5 + $0x34] sm:$0xf]
    %v74 = vld [vmem:[#allocation5 + $0x38] sm:$0xf]
    %v75 = vld [vmem:[#allocation5 + $0x3c] sm:$0xf]
    %v76 = vld [vmem:[#allocation2] sm:$0xf]
    %v77 = vld [vmem:[#allocation2 + $0x4] sm:$0xf]
    %v78 = vld [vmem:[#allocation2 + $0x8] sm:$0xf]
    %v79 = vld [vmem:[#allocation2 + $0xc] sm:$0xf]
    %v80 = vld [vmem:[#allocation2 + $0x10] sm:$0xf]
    %v81 = vld [vmem:[#allocation2 + $0x14] sm:$0xf]
    %v82 = vld [vmem:[#allocation2 + $0x18] sm:$0xf]
    %v83 = vld [vmem:[#allocation2 + $0x1c] sm:$0xf]
    %v84 = vld [vmem:[#allocation2 + $0x20] sm:$0xf]
    %v85 = vld [vmem:[#allocation2 + $0x24] sm:$0xf]
    %v86 = vld [vmem:[#allocation2 + $0x28] sm:$0xf]
    %v87 = vld [vmem:[#allocation2 + $0x2c] sm:$0xf]
    %v88 = vld [vmem:[#allocation2 + $0x30] sm:$0xf]
    %v89 = vld [vmem:[#allocation2 + $0x34] sm:$0xf]
    %v90 = vld [vmem:[#allocation2 + $0x38] sm:$0xf]
    %v91 = vld [vmem:[#allocation2 + $0x3c] sm:$0xf]
    %v108 = vunpack.c.l.b16 %v60
    %v109 = vunpack.c.l.b16 %v61
    %v110 = vunpack.c.l.b16 %v62
    %v111 = vunpack.c.l.b16 %v63
    %v112 = vunpack.c.l.b16 %v64
    %v113 = vunpack.c.l.b16 %v65
    %v114 = vunpack.c.l.b16 %v66
    %v115 = vunpack.c.l.b16 %v67
    %v116 = vunpack.c.l.b16 %v68
    %v117 = vunpack.c.l.b16 %v69
    %v118 = vunpack.c.l.b16 %v70
    %v119 = vunpack.c.l.b16 %v71
    %v120 = vunpack.c.l.b16 %v72
    %v121 = vunpack.c.l.b16 %v73
    %v122 = vunpack.c.l.b16 %v74
    %v123 = vunpack.c.l.b16 %v75
    %v124 = vpack.c.b16 %v109, %v108
    %v125 = vpack.c.b16 %v111, %v110
    %v126 = vpack.c.b16 %v113, %v112
    %v127 = vpack.c.b16 %v115, %v114
    %v128 = vpack.c.b16 %v117, %v116
    %v129 = vpack.c.b16 %v119, %v118
    %v130 = vpack.c.b16 %v121, %v120
    %v131 = vpack.c.b16 %v123, %v122
    %140 = vxpose.xlu0.c.b16.start [1/8] %v124, 128
    %141 = vxpose.xlu0.c.b16.cont [2/8] %v125, 128
    %142 = vxpose.xlu0.c.b16.cont [3/8] %v126, 128
    %143 = vxpose.xlu0.c.b16.cont [4/8] %v127, 128
    %144 = vxpose.xlu0.c.b16.cont [5/8] %v128, 128
    %145 = vxpose.xlu0.c.b16.cont [6/8] %v129, 128
    %146 = vxpose.xlu0.c.b16.cont [7/8] %v130, 128
    %147 = vxpose.xlu0.c.b16.end [8/8] %v131, 128
    %v148 = vpop.trf.xlu0
    %v149 = vpop.trf.xlu0
    %v150 = vpop.trf.xlu0
    %v151 = vpop.trf.xlu0
    %v152 = vpop.trf.xlu0
    %v153 = vpop.trf.xlu0
    %v154 = vpop.trf.xlu0
    %v155 = vpop.trf.xlu0
    %v172 = vunpack.c.l.b16 %v76
    %v173 = vunpack.c.l.b16 %v77
    %v174 = vunpack.c.l.b16 %v78
    %v175 = vunpack.c.l.b16 %v79
    %v176 = vunpack.c.l.b16 %v80
    %v177 = vunpack.c.l.b16 %v81
    %v178 = vunpack.c.l.b16 %v82
    %v179 = vunpack.c.l.b16 %v83
    %v180 = vunpack.c.l.b16 %v84
    %v181 = vunpack.c.l.b16 %v85
    %v182 = vunpack.c.l.b16 %v86
    %v183 = vunpack.c.l.b16 %v87
    %v184 = vunpack.c.l.b16 %v88
    %v185 = vunpack.c.l.b16 %v89
    %v186 = vunpack.c.l.b16 %v90
    %v187 = vunpack.c.l.b16 %v91
    %v188 = vpack.c.b16 %v173, %v172
    %v189 = vpack.c.b16 %v175, %v174
    %v190 = vpack.c.b16 %v177, %v176
    %v191 = vpack.c.b16 %v179, %v178
    %v192 = vpack.c.b16 %v181, %v180
    %v193 = vpack.c.b16 %v183, %v182
    %v194 = vpack.c.b16 %v185, %v184
    %v195 = vpack.c.b16 %v187, %v186
    %204 = vmatprep.subr.bf16.mxu0 0
    %205 = vmatpush1.bf16.msra.mxu0 %v195
    %206 = vmatprep.subr.bf16.mxu0 0
    %207 = vmatpush1.bf16.msra.mxu0 %v194
    %208 = vmatprep.subr.bf16.mxu0 0
    %209 = vmatpush1.bf16.msra.mxu0 %v193
    %210 = vmatprep.subr.bf16.mxu0 0
    %211 = vmatpush1.bf16.msra.mxu0 %v192
    %212 = vmatprep.subr.bf16.mxu0 0
    %213 = vmatpush1.bf16.msra.mxu0 %v191
    %214 = vmatprep.subr.bf16.mxu0 0
    %215 = vmatpush1.bf16.msra.mxu0 %v190
    %216 = vmatprep.subr.bf16.mxu0 0
    %217 = vmatpush1.bf16.msra.mxu0 %v189
    %218 = vmatprep.subr.bf16.mxu0 0
    %219 = vmatpush1.bf16.msra.mxu0 %v188
    %220 = vmatprep.subr.bf16.mxu0 0
    %221 = vmatpush2.bf16.msra.mxu0 0
    %222 = vmatprep.subr.bf16.mxu0 0
    %223 = vmatpush2.bf16.msra.mxu0 0
    %224 = vmatprep.subr.bf16.mxu0 0
    %225 = vmatpush2.bf16.msra.mxu0 0
    %226 = vmatprep.subr.bf16.mxu0 0
    %227 = vmatpush2.bf16.msra.mxu0 0
    %228 = vmatprep.subr.bf16.mxu0 0
    %229 = vmatpush2.bf16.msra.mxu0 0
    %230 = vmatprep.subr.bf16.mxu0 0
    %231 = vmatpush2.bf16.msra.mxu0 0
    %232 = vmatprep.subr.bf16.mxu0 0
    %233 = vmatpush2.bf16.msra.mxu0 0
    %234 = vmatprep.subr.bf16.mxu0 0
    %235 = vmatpush2.bf16.msra.mxu0 0
    %236 = vmatprep.mubr.bf16.mxu0 0
    %237 = vmatmul.mubr.bf16.gmra.mxu0 %v148
    %v238 = vpop.f32.mrf.mxu0
    %v239 = vadd.f32 0.0, %v238
    %v240 = vpop.f32.mrf.mxu0
    %v241 = vpop.f32.mrf.mxu0
    %v242 = vadd.f32 0.0, %v241
    %v243 = vpop.f32.mrf.mxu0
    %244 = vmatprep.mubr.bf16.mxu0 0
    %245 = vmatmul.mubr.bf16.gmra.mxu0 %v149
    %v246 = vpop.f32.mrf.mxu0
    %v247 = vadd.f32 0.0, %v246
    %v248 = vpop.f32.mrf.mxu0
    %v249 = vpop.f32.mrf.mxu0
    %v250 = vadd.f32 0.0, %v249
    %v251 = vpop.f32.mrf.mxu0
    %252 = vmatprep.mubr.bf16.mxu0 0
    %253 = vmatmul.mubr.bf16.gmra.mxu0 %v150
    %v254 = vpop.f32.mrf.mxu0
    %v255 = vadd.f32 0.0, %v254
    %v256 = vpop.f32.mrf.mxu0
    %v257 = vpop.f32.mrf.mxu0
    %v258 = vadd.f32 0.0, %v257
    %v259 = vpop.f32.mrf.mxu0
    %260 = vmatprep.mubr.bf16.mxu0 0
    %261 = vmatmul.mubr.bf16.gmra.mxu0 %v151
    %v262 = vpop.f32.mrf.mxu0
    %v263 = vadd.f32 0.0, %v262
    %v264 = vpop.f32.mrf.mxu0
    %v265 = vpop.f32.mrf.mxu0
    %v266 = vadd.f32 0.0, %v265
    %v267 = vpop.f32.mrf.mxu0
    %268 = vmatprep.mubr.bf16.mxu0 0
    %269 = vmatmul.mubr.bf16.gmra.mxu0 %v152
    %v270 = vpop.f32.mrf.mxu0
    %v271 = vadd.f32 0.0, %v270
    %v272 = vpop.f32.mrf.mxu0
    %v273 = vpop.f32.mrf.mxu0
    %v274 = vadd.f32 0.0, %v273
    %v275 = vpop.f32.mrf.mxu0
    %276 = vmatprep.mubr.bf16.mxu0 0
    %277 = vmatmul.mubr.bf16.gmra.mxu0 %v153
    %v278 = vpop.f32.mrf.mxu0
    %v279 = vadd.f32 0.0, %v278
    %v280 = vpop.f32.mrf.mxu0
    %v281 = vpop.f32.mrf.mxu0
    %v282 = vadd.f32 0.0, %v281
    %v283 = vpop.f32.mrf.mxu0
    %284 = vmatprep.mubr.bf16.mxu0 0
    %285 = vmatmul.mubr.bf16.gmra.mxu0 %v154
    %v286 = vpop.f32.mrf.mxu0
    %v287 = vadd.f32 0.0, %v286
    %v288 = vpop.f32.mrf.mxu0
    %v289 = vpop.f32.mrf.mxu0
    %v290 = vadd.f32 0.0, %v289
    %v291 = vpop.f32.mrf.mxu0
    %292 = vmatprep.mubr.bf16.mxu0 0
    %293 = vmatmul.mubr.bf16.gmra.mxu0 %v155
    %v294 = vpop.f32.mrf.mxu0
    %v295 = vadd.f32 0.0, %v294
    %v296 = vpop.f32.mrf.mxu0
    %v297 = vpop.f32.mrf.mxu0
    %v298 = vadd.f32 0.0, %v297
    %v299 = vpop.f32.mrf.mxu0
    %300 = vdwg.mxu0
    %v301 = vpack.c.bf16 %v242, %v239
    %v302 = vpack.c.bf16 %v250, %v247
    %v303 = vpack.c.bf16 %v258, %v255
    %v304 = vpack.c.bf16 %v266, %v263
    %v305 = vpack.c.bf16 %v274, %v271
    %v306 = vpack.c.bf16 %v282, %v279
    %v307 = vpack.c.bf16 %v290, %v287
    %v308 = vpack.c.bf16 %v298, %v295
    %v317 = vunpack.c.l.b16 %v301
    %v318 = vunpack.c.h.b16 %v301
    %v319 = vunpack.c.l.b16 %v302
    %v320 = vunpack.c.h.b16 %v302
    %v321 = vunpack.c.l.b16 %v303
    %v322 = vunpack.c.h.b16 %v303
    %v323 = vunpack.c.l.b16 %v304
    %v324 = vunpack.c.h.b16 %v304
    %v325 = vunpack.c.l.b16 %v305
    %v326 = vunpack.c.h.b16 %v305
    %v327 = vunpack.c.l.b16 %v306
    %v328 = vunpack.c.h.b16 %v306
    %v329 = vunpack.c.l.b16 %v307
    %v330 = vunpack.c.h.b16 %v307
    %v331 = vunpack.c.l.b16 %v308
    %v332 = vunpack.c.h.b16 %v308
    %v333 = vpack.c.b16 %v317, %v317
    %v334 = vpack.c.b16 %v318, %v318
    %v335 = vpack.c.b16 %v319, %v319
    %v336 = vpack.c.b16 %v320, %v320
    %v337 = vpack.c.b16 %v321, %v321
    %v338 = vpack.c.b16 %v322, %v322
    %v339 = vpack.c.b16 %v323, %v323
    %v340 = vpack.c.b16 %v324, %v324
    %v341 = vpack.c.b16 %v325, %v325
    %v342 = vpack.c.b16 %v326, %v326
    %v343 = vpack.c.b16 %v327, %v327
    %v344 = vpack.c.b16 %v328, %v328
    %v345 = vpack.c.b16 %v329, %v329
    %v346 = vpack.c.b16 %v330, %v330
    %v347 = vpack.c.b16 %v331, %v331
    %v348 = vpack.c.b16 %v332, %v332
    %365 = vst [vmem:[#allocation8] sm:$0xf] %v333
    %366 = vst [vmem:[#allocation8 + $0x4] sm:$0xf] %v334
    %367 = vst [vmem:[#allocation8 + $0x8] sm:$0xf] %v335
    %368 = vst [vmem:[#allocation8 + $0xc] sm:$0xf] %v336
    %369 = vst [vmem:[#allocation8 + $0x10] sm:$0xf] %v337
    %370 = vst [vmem:[#allocation8 + $0x14] sm:$0xf] %v338
    %371 = vst [vmem:[#allocation8 + $0x18] sm:$0xf] %v339
    %372 = vst [vmem:[#allocation8 + $0x1c] sm:$0xf] %v340
    %373 = vst [vmem:[#allocation8 + $0x20] sm:$0xf] %v341
    %374 = vst [vmem:[#allocation8 + $0x24] sm:$0xf] %v342
    %375 = vst [vmem:[#allocation8 + $0x28] sm:$0xf] %v343
    %376 = vst [vmem:[#allocation8 + $0x2c] sm:$0xf] %v344
    %377 = vst [vmem:[#allocation8 + $0x30] sm:$0xf] %v345
    %378 = vst [vmem:[#allocation8 + $0x34] sm:$0xf] %v346
    %379 = vst [vmem:[#allocation8 + $0x38] sm:$0xf] %v347
    %380 = vst [vmem:[#allocation8 + $0x3c] sm:$0xf] %v348
    %s381 = smul.u32 0, 128
    %s382 = sshra.s32 %s381, 3
    %s383 = sand.u32 %s381, 7
    %s384 = smul.addr %s382, 4
    %s385 = scalar_lea.vmem [#allocation5], %s384
    %v386 = vld [vmem:[%s385] sm:$0xf]
    %v387 = vld [vmem:[%s385 + $0x4] sm:$0xf]
    %v388 = vld [vmem:[%s385 + $0x8] sm:$0xf]
    %v389 = vld [vmem:[%s385 + $0xc] sm:$0xf]
    %v390 = vld [vmem:[%s385 + $0x10] sm:$0xf]
    %v391 = vld [vmem:[%s385 + $0x14] sm:$0xf]
    %v392 = vld [vmem:[%s385 + $0x18] sm:$0xf]
    %v393 = vld [vmem:[%s385 + $0x1c] sm:$0xf]
    %v394 = vld [vmem:[%s385 + $0x20] sm:$0xf]
    %v395 = vld [vmem:[%s385 + $0x24] sm:$0xf]
    %v396 = vld [vmem:[%s385 + $0x28] sm:$0xf]
    %v397 = vld [vmem:[%s385 + $0x2c] sm:$0xf]
    %v398 = vld [vmem:[%s385 + $0x30] sm:$0xf]
    %v399 = vld [vmem:[%s385 + $0x34] sm:$0xf]
    %v400 = vld [vmem:[%s385 + $0x38] sm:$0xf]
    %v401 = vld [vmem:[%s385 + $0x3c] sm:$0xf]
    %v402 = vld [vmem:[#allocation7] sm:$0xf]
    %v403 = vld [vmem:[#allocation7 + $0x4] sm:$0xf]
    %v404 = vld [vmem:[#allocation7 + $0x8] sm:$0xf]
    %v405 = vld [vmem:[#allocation7 + $0xc] sm:$0xf]
    %v406 = vld [vmem:[#allocation7 + $0x10] sm:$0xf]
    %v407 = vld [vmem:[#allocation7 + $0x14] sm:$0xf]
    %v408 = vld [vmem:[#allocation7 + $0x18] sm:$0xf]
    %v409 = vld [vmem:[#allocation7 + $0x1c] sm:$0xf]
    %v410 = vld [vmem:[#allocation7 + $0x20] sm:$0xf]
    %v411 = vld [vmem:[#allocation7 + $0x24] sm:$0xf]
    %v412 = vld [vmem:[#allocation7 + $0x28] sm:$0xf]
    %v413 = vld [vmem:[#allocation7 + $0x2c] sm:$0xf]
    %v414 = vld [vmem:[#allocation7 + $0x30] sm:$0xf]
    %v415 = vld [vmem:[#allocation7 + $0x34] sm:$0xf]
    %v416 = vld [vmem:[#allocation7 + $0x38] sm:$0xf]
    %v417 = vld [vmem:[#allocation7 + $0x3c] sm:$0xf]
    %v434 = vunpack.c.l.b16 %v386
    %v435 = vunpack.c.l.b16 %v387
    %v436 = vunpack.c.l.b16 %v388
    %v437 = vunpack.c.l.b16 %v389
    %v438 = vunpack.c.l.b16 %v390
    %v439 = vunpack.c.l.b16 %v391
    %v440 = vunpack.c.l.b16 %v392
    %v441 = vunpack.c.l.b16 %v393
    %v442 = vunpack.c.l.b16 %v394
    %v443 = vunpack.c.l.b16 %v395
    %v444 = vunpack.c.l.b16 %v396
    %v445 = vunpack.c.l.b16 %v397
    %v446 = vunpack.c.l.b16 %v398
    %v447 = vunpack.c.l.b16 %v399
    %v448 = vunpack.c.l.b16 %v400
    %v449 = vunpack.c.l.b16 %v401
    %v450 = vpack.c.b16 %v435, %v434
    %v451 = vpack.c.b16 %v437, %v436
    %v452 = vpack.c.b16 %v439, %v438
    %v453 = vpack.c.b16 %v441, %v440
    %v454 = vpack.c.b16 %v443, %v442
    %v455 = vpack.c.b16 %v445, %v444
    %v456 = vpack.c.b16 %v447, %v446
    %v457 = vpack.c.b16 %v449, %v448
    %v482 = vunpack.c.l.b16 %v402
    %v483 = vunpack.c.l.b16 %v403
    %v484 = vunpack.c.l.b16 %v404
    %v485 = vunpack.c.l.b16 %v405
    %v486 = vunpack.c.l.b16 %v406
    %v487 = vunpack.c.l.b16 %v407
    %v488 = vunpack.c.l.b16 %v408
    %v489 = vunpack.c.l.b16 %v409
    %v490 = vunpack.c.l.b16 %v410
    %v491 = vunpack.c.l.b16 %v411
    %v492 = vunpack.c.l.b16 %v412
    %v493 = vunpack.c.l.b16 %v413
    %v494 = vunpack.c.l.b16 %v414
    %v495 = vunpack.c.l.b16 %v415
    %v496 = vunpack.c.l.b16 %v416
    %v497 = vunpack.c.l.b16 %v417
    %v498 = vpack.c.b16 %v483, %v482
    %v499 = vpack.c.b16 %v485, %v484
    %v500 = vpack.c.b16 %v487, %v486
    %v501 = vpack.c.b16 %v489, %v488
    %v502 = vpack.c.b16 %v491, %v490
    %v503 = vpack.c.b16 %v493, %v492
    %v504 = vpack.c.b16 %v495, %v494
    %v505 = vpack.c.b16 %v497, %v496
    %514 = vmatprep.subr.bf16.mxu0 0
    %515 = vmatpush1.bf16.msra.mxu0 %v505
    %516 = vmatprep.subr.bf16.mxu0 0
    %517 = vmatpush1.bf16.msra.mxu0 %v504
    %518 = vmatprep.subr.bf16.mxu0 0
    %519 = vmatpush1.bf16.msra.mxu0 %v503
    %520 = vmatprep.subr.bf16.mxu0 0
    %521 = vmatpush1.bf16.msra.mxu0 %v502
    %522 = vmatprep.subr.bf16.mxu0 0
    %523 = vmatpush1.bf16.msra.mxu0 %v501
    %524 = vmatprep.subr.bf16.mxu0 0
    %525 = vmatpush1.bf16.msra.mxu0 %v500
    %526 = vmatprep.subr.bf16.mxu0 0
    %527 = vmatpush1.bf16.msra.mxu0 %v499
    %528 = vmatprep.subr.bf16.mxu0 0
    %529 = vmatpush1.bf16.msra.mxu0 %v498
    %530 = vmatprep.subr.bf16.mxu0 0
    %531 = vmatpush2.bf16.msra.mxu0 0
    %532 = vmatprep.subr.bf16.mxu0 0
    %533 = vmatpush2.bf16.msra.mxu0 0
    %534 = vmatprep.subr.bf16.mxu0 0
    %535 = vmatpush2.bf16.msra.mxu0 0
    %536 = vmatprep.subr.bf16.mxu0 0
    %537 = vmatpush2.bf16.msra.mxu0 0
    %538 = vmatprep.subr.bf16.mxu0 0
    %539 = vmatpush2.bf16.msra.mxu0 0
    %540 = vmatprep.subr.bf16.mxu0 0
    %541 = vmatpush2.bf16.msra.mxu0 0
    %542 = vmatprep.subr.bf16.mxu0 0
    %543 = vmatpush2.bf16.msra.mxu0 0
    %544 = vmatprep.subr.bf16.mxu0 0
    %545 = vmatpush2.bf16.msra.mxu0 0
    %546 = vmatprep.mubr.bf16.mxu0 0
    %547 = vmatmul.mubr.bf16.gmra.mxu0 %v450
    %v548 = vpop.f32.mrf.mxu0
    %v549 = vadd.f32 0.0, %v548
    %v550 = vpop.f32.mrf.mxu0
    %v551 = vpop.f32.mrf.mxu0
    %v552 = vadd.f32 0.0, %v551
    %v553 = vpop.f32.mrf.mxu0
    %554 = vmatprep.mubr.bf16.mxu0 0
    %555 = vmatmul.mubr.bf16.gmra.mxu0 %v451
    %v556 = vpop.f32.mrf.mxu0
    %v557 = vadd.f32 0.0, %v556
    %v558 = vpop.f32.mrf.mxu0
    %v559 = vpop.f32.mrf.mxu0
    %v560 = vadd.f32 0.0, %v559
    %v561 = vpop.f32.mrf.mxu0
    %562 = vmatprep.mubr.bf16.mxu0 0
    %563 = vmatmul.mubr.bf16.gmra.mxu0 %v452
    %v564 = vpop.f32.mrf.mxu0
    %v565 = vadd.f32 0.0, %v564
    %v566 = vpop.f32.mrf.mxu0
    %v567 = vpop.f32.mrf.mxu0
    %v568 = vadd.f32 0.0, %v567
    %v569 = vpop.f32.mrf.mxu0
    %570 = vmatprep.mubr.bf16.mxu0 0
    %571 = vmatmul.mubr.bf16.gmra.mxu0 %v453
    %v572 = vpop.f32.mrf.mxu0
    %v573 = vadd.f32 0.0, %v572
    %v574 = vpop.f32.mrf.mxu0
    %v575 = vpop.f32.mrf.mxu0
    %v576 = vadd.f32 0.0, %v575
    %v577 = vpop.f32.mrf.mxu0
    %578 = vmatprep.mubr.bf16.mxu0 0
    %579 = vmatmul.mubr.bf16.gmra.mxu0 %v454
    %v580 = vpop.f32.mrf.mxu0
    %v581 = vadd.f32 0.0, %v580
    %v582 = vpop.f32.mrf.mxu0
    %v583 = vpop.f32.mrf.mxu0
    %v584 = vadd.f32 0.0, %v583
    %v585 = vpop.f32.mrf.mxu0
    %586 = vmatprep.mubr.bf16.mxu0 0
    %587 = vmatmul.mubr.bf16.gmra.mxu0 %v455
    %v588 = vpop.f32.mrf.mxu0
    %v589 = vadd.f32 0.0, %v588
    %v590 = vpop.f32.mrf.mxu0
    %v591 = vpop.f32.mrf.mxu0
    %v592 = vadd.f32 0.0, %v591
    %v593 = vpop.f32.mrf.mxu0
    %594 = vmatprep.mubr.bf16.mxu0 0
    %595 = vmatmul.mubr.bf16.gmra.mxu0 %v456
    %v596 = vpop.f32.mrf.mxu0
    %v597 = vadd.f32 0.0, %v596
    %v598 = vpop.f32.mrf.mxu0
    %v599 = vpop.f32.mrf.mxu0
    %v600 = vadd.f32 0.0, %v599
    %v601 = vpop.f32.mrf.mxu0
    %602 = vmatprep.mubr.bf16.mxu0 0
    %603 = vmatmul.mubr.bf16.gmra.mxu0 %v457
    %v604 = vpop.f32.mrf.mxu0
    %v605 = vadd.f32 0.0, %v604
    %v606 = vpop.f32.mrf.mxu0
    %v607 = vpop.f32.mrf.mxu0
    %v608 = vadd.f32 0.0, %v607
    %v609 = vpop.f32.mrf.mxu0
    %610 = vdwg.mxu0
    %v611 = vpack.c.bf16 %v552, %v549
    %v612 = vpack.c.bf16 %v560, %v557
    %v613 = vpack.c.bf16 %v568, %v565
    %v614 = vpack.c.bf16 %v576, %v573
    %v615 = vpack.c.bf16 %v584, %v581
    %v616 = vpack.c.bf16 %v592, %v589
    %v617 = vpack.c.bf16 %v600, %v597
    %v618 = vpack.c.bf16 %v608, %v605
    %v627 = vunpack.c.l.b16 %v611
    %v628 = vunpack.c.h.b16 %v611
    %v629 = vunpack.c.l.b16 %v612
    %v630 = vunpack.c.h.b16 %v612
    %v631 = vunpack.c.l.b16 %v613
    %v632 = vunpack.c.h.b16 %v613
    %v633 = vunpack.c.l.b16 %v614
    %v634 = vunpack.c.h.b16 %v614
    %v635 = vunpack.c.l.b16 %v615
    %v636 = vunpack.c.h.b16 %v615
    %v637 = vunpack.c.l.b16 %v616
    %v638 = vunpack.c.h.b16 %v616
    %v639 = vunpack.c.l.b16 %v617
    %v640 = vunpack.c.h.b16 %v617
    %v641 = vunpack.c.l.b16 %v618
    %v642 = vunpack.c.h.b16 %v618
    %v643 = vpack.c.b16 %v627, %v627
    %v644 = vpack.c.b16 %v628, %v628
    %v645 = vpack.c.b16 %v629, %v629
    %v646 = vpack.c.b16 %v630, %v630
    %v647 = vpack.c.b16 %v631, %v631
    %v648 = vpack.c.b16 %v632, %v632
    %v649 = vpack.c.b16 %v633, %v633
    %v650 = vpack.c.b16 %v634, %v634
    %v651 = vpack.c.b16 %v635, %v635
    %v652 = vpack.c.b16 %v636, %v636
    %v653 = vpack.c.b16 %v637, %v637
    %v654 = vpack.c.b16 %v638, %v638
    %v655 = vpack.c.b16 %v639, %v639
    %v656 = vpack.c.b16 %v640, %v640
    %v657 = vpack.c.b16 %v641, %v641
    %v658 = vpack.c.b16 %v642, %v642
    %675 = vst [vmem:[#allocation9] sm:$0xf] %v643
    %676 = vst [vmem:[#allocation9 + $0x4] sm:$0xf] %v644
    %677 = vst [vmem:[#allocation9 + $0x8] sm:$0xf] %v645
    %678 = vst [vmem:[#allocation9 + $0xc] sm:$0xf] %v646
    %679 = vst [vmem:[#allocation9 + $0x10] sm:$0xf] %v647
    %680 = vst [vmem:[#allocation9 + $0x14] sm:$0xf] %v648
    %681 = vst [vmem:[#allocation9 + $0x18] sm:$0xf] %v649
    %682 = vst [vmem:[#allocation9 + $0x1c] sm:$0xf] %v650
    %683 = vst [vmem:[#allocation9 + $0x20] sm:$0xf] %v651
    %684 = vst [vmem:[#allocation9 + $0x24] sm:$0xf] %v652
    %685 = vst [vmem:[#allocation9 + $0x28] sm:$0xf] %v653
    %686 = vst [vmem:[#allocation9 + $0x2c] sm:$0xf] %v654
    %687 = vst [vmem:[#allocation9 + $0x30] sm:$0xf] %v655
    %688 = vst [vmem:[#allocation9 + $0x34] sm:$0xf] %v656
    %689 = vst [vmem:[#allocation9 + $0x38] sm:$0xf] %v657
    %690 = vst [vmem:[#allocation9 + $0x3c] sm:$0xf] %v658
    // Predicated region
    $region26: #{tpu_custom_call.1} parent=1 // pred_check
      _
    $region27: #{tpu_custom_call.1} parent=1 // pred_check_branch
      %692 = sbr.rel (0) target = $region29
    $region28: #{tpu_custom_call.1} parent=1 // pred_region
      %s694 = ssub.s32 1024, 1024
      %695 = vsyncadd [#allocation4], %s694
      %s696 = sshll.u32 [#allocation8], 4
      %s697 = int_to_ptr.vmem [resolvable:$true] %s696
      %702 = dma.vmem_to_hbm [thread:$0]  %s697, 1024, %s3, [#allocation4], 64, 64, 4
    $region29: #{tpu_custom_call.1} parent=1 // pred_fallthru
      _
    // Predicated region
    $region30: #{tpu_custom_call.1} parent=1 // pred_check
      _
    $region31: #{tpu_custom_call.1} parent=1 // pred_check_branch
      %704 = sbr.rel (0) target = $region33
    $region32: #{tpu_custom_call.1} parent=1 // pred_region
      %s706 = ssub.s32 1024, 1024
      %707 = vsyncadd [#allocation10], %s706
      %s708 = sshll.u32 [#allocation9], 4
      %s709 = int_to_ptr.vmem [resolvable:$true] %s708
      %714 = dma.vmem_to_hbm [thread:$0]  %s709, 1024, %s4, [#allocation10], 64, 64, 4
    $region33: #{tpu_custom_call.1} parent=1 // pred_fallthru
      _
    // Predicated region
    $region34: #{tpu_custom_call.1} parent=1 // pred_check
      _
    $region35: #{tpu_custom_call.1} parent=1 // pred_check_branch
      %716 = sbr.rel (0) target = $region37
    $region36: #{tpu_custom_call.1} parent=1 // pred_region
      %717 = dma.done [#allocation4], 1024
    $region37: #{tpu_custom_call.1} parent=1 // pred_fallthru
      _
    // Predicated region
    $region38: #{tpu_custom_call.1} parent=1 // pred_check
      _
    $region39: #{tpu_custom_call.1} parent=1 // pred_check_branch
      %719 = sbr.rel (0) target = $region41
    $region40: #{tpu_custom_call.1} parent=1 // pred_region
      %720 = dma.done [#allocation10], 1024
    $region41: #{tpu_custom_call.1} parent=1 // pred_fallthru
      _
    %721 = vsyncpa [#allocation3], 1
    %722 = vsyncpa [#allocation6], 1
    %723 = vsyncpa [#allocation4], 1
    %724 = vsyncpa [#allocation10], 1

</llo_original>
